<compile_context>
chip_gen: v7x
topology: tpu7x:2x2x1
jax: 0.10.0
libtpu: 0.0.40
codegen_flags: <defaults>
</compile_context>

<pallas_src>
import functools

import jax
import jax.numpy as jnp
from jax import lax
from jax.experimental import pallas as pl
from jax.experimental.pallas import tpu as pltpu


def make_divisible(v, divisor=8, min_value=None, round_limit=0.9):
    min_value = min_value or divisor
    new_v = max(min_value, int(v + divisor / 2) // divisor * divisor)
    if new_v < round_limit * v:
        new_v += divisor
    return new_v


def _sk_kernel(x1_ref, x2_ref, wT_ref, sb_ref, wr_ref, sbr_ref, ws_ref, vm_ref,
               o_ref, col_ref, *, H, W, Wp, CIN2, COUT, PAD, DILS):
    """One batch element per grid step; channels on sublanes, spatial on lanes.

    x1_ref, x2_ref : (1, CIN2, (Hp+1)*Wp) bf16  per-path padded CHW input, spatial flattened
    wT_ref         : (2*COUT, 2*9*CIN2)   bf16  block-diagonal fused conv weight (transposed)
    sb_ref         : (2*COUT, 2)          f32   folded BN [scale, bias] per conv out channel
    wr_ref         : (COUT, A)            f32   fc_reduce weight^T
    sbr_ref        : (2, A)               f32   folded BN [scale; bias] for the attn BN
    ws_ref         : (2*COUT, A)          f32   fc_select weight
    vm_ref         : (1, H*Wp)            f32   1.0 on valid spatial columns, 0.0 on junk
    o_ref          : (1, COUT, H*Wp)      f32   output, NCHW with the W axis still Wp-wide
    col_ref        : (2*9*CIN2, H*Wp)     bf16  VMEM im2col^T scratch
    """
    N = H * Wp   # output columns (includes the Wp - W junk columns per image row)

    # --- im2col^T: 9 taps x 2 paths, each one dense (CIN2 sublane x N lane) store.
    # A tap is a static lane-offset window of the flattened padded input.
    k = 0
    for x_ref, d in ((x1_ref, DILS[0]), (x2_ref, DILS[1])):
        for kh in range(3):
            for kw in range(3):
                off = (PAD + d * (kh - 1)) * Wp + (PAD + d * (kw - 1))
                col_ref[k * CIN2:(k + 1) * CIN2, :] = x_ref[0, :, off:off + N]
                k += 1

    # --- both dilated 3x3 conv paths as ONE MXU matmul (bf16 in, f32 accumulate) ---
    # rows [:COUT] = path 1, rows [COUT:] = path 2
    p = jnp.dot(wT_ref[...], col_ref[...], preferred_element_type=jnp.float32)
    p = jnp.maximum(p * sb_ref[:, 0:1] + sb_ref[:, 1:2], 0.0)    # fused BN + ReLU

    # --- SelectiveKernelAttn (tiny; VPU/XLU only; junk columns masked from the pool) ---
    pooled2 = jnp.sum(p * vm_ref[...], axis=1, keepdims=True) * (1.0 / (H * W))
    pooled = pooled2[:COUT, :] + pooled2[COUT:, :]               # (COUT, 1) path sum
    z = jnp.sum(wr_ref[...] * pooled, axis=0, keepdims=True)     # fc_reduce -> (1, A)
    z = jnp.maximum(z * sbr_ref[0:1, :] + sbr_ref[1:2, :], 0.0)  # BN + ReLU
    logits = jnp.sum(ws_ref[...] * z, axis=1, keepdims=True)     # fc_select -> (2*COUT, 1)

    l1 = logits[:COUT, :]
    l2 = logits[COUT:, :]
    m = jnp.maximum(l1, l2)                                      # 2-way softmax over paths
    e1 = jnp.exp(l1 - m)
    e2 = jnp.exp(l2 - m)
    inv = pl.reciprocal(e1 + e2, approx=True)                    # EUP slot
    a1 = e1 * inv
    a2 = 1.0 - a1

    # attn-weighted path sum; (COUT, N) f32 dense-lane store, already NCHW-ordered.
    o_ref[0, :, :] = a1 * p[:COUT, :] + a2 * p[COUT:, :]


def selective_kernel_forward(x_nchw, params):
    """x_nchw: (B, CIN, H, W) float32. Returns (B, COUT, H, W) float32."""
    B, CIN, H, W = x_nchw.shape
    CIN2 = CIN // 2
    wT = params["w_fused_t"]      # (2*COUT, 2*9*CIN2) bf16, block diagonal
    sb = params["sb_fused"]       # (2*COUT, 2) f32
    wr = params["w_reduce_t"]     # (COUT, A) f32
    sbr = params["sb_reduce"]     # (2, A) f32
    ws = params["w_select"]       # (2*COUT, A) f32
    COUT = sb.shape[0] // 2
    A = wr.shape[-1]
    DILS = (1, 2)
    PAD = max(DILS)               # im2col windows assume PAD == max(dilations)
    assert PAD == max(DILS) and COUT % 8 == 0
    Wp = W + 2 * PAD
    LIN = (H + 2 * PAD + 1) * Wp  # +1 trailing zero row keeps every tap window in bounds
    NCOL = H * Wp
    K2 = wT.shape[1]

    # lane-dense per-path inputs: NCHW already has channels leading, so this is just
    # split + pad + bf16 cast + flatten (no transpose around the kernel at all).
    xb = x_nchw.astype(jnp.bfloat16)
    pad_cfg = ((0, 0), (0, 0), (PAD, PAD + 1), (PAD, PAD))
    x1p = jnp.pad(xb[:, :CIN2], pad_cfg).reshape(B, CIN2, LIN)
    x2p = jnp.pad(xb[:, CIN2:], pad_cfg).reshape(B, CIN2, LIN)

    # valid-column mask for the global average pool (junk columns have w >= W)
    vmask = (jnp.arange(NCOL, dtype=jnp.int32) % Wp < W).astype(jnp.float32)
    vmask = vmask.reshape(1, NCOL)

    kernel = functools.partial(_sk_kernel, H=H, W=W, Wp=Wp, CIN2=CIN2,
                               COUT=COUT, PAD=PAD, DILS=DILS)

    out_flat = pl.pallas_call(
        kernel,
        out_shape=jax.ShapeDtypeStruct((B, COUT, NCOL), jnp.float32),
        grid=(B,),
        in_specs=[
            pl.BlockSpec((1, CIN2, LIN), lambda b: (b, 0, 0)),
            pl.BlockSpec((1, CIN2, LIN), lambda b: (b, 0, 0)),
            pl.BlockSpec((2 * COUT, K2), lambda b: (0, 0)),
            pl.BlockSpec((2 * COUT, 2), lambda b: (0, 0)),
            pl.BlockSpec((COUT, A), lambda b: (0, 0)),
            pl.BlockSpec((2, A), lambda b: (0, 0)),
            pl.BlockSpec((2 * COUT, A), lambda b: (0, 0)),
            pl.BlockSpec((1, NCOL), lambda b: (0, 0)),
        ],
        out_specs=pl.BlockSpec((1, COUT, NCOL), lambda b: (b, 0, 0)),
        scratch_shapes=[pltpu.VMEM((K2, NCOL), jnp.bfloat16)],
        compiler_params=pltpu.CompilerParams(
            dimension_semantics=("parallel",)),
    )(x1p, x2p, wT, sb, wr, sbr, ws, vmask)

    # (B, COUT, H*Wp) -> drop the junk columns -> (B, COUT, H, W); already NCHW.
    return out_flat.reshape(B, COUT, H, Wp)[..., :W]


# ----------------------------- reference (plain JAX) -----------------------------
def ref_forward(x, raw):
    """Pure-JAX NCHW reference mirroring the PyTorch module (eval mode).

    Conv operands are rounded to bf16 to match the kernel's bf16 MXU matmul
    (accumulation stays f32 in both)."""
    eps = 1e-5

    def conv(xs, w_oihw, d):
        xs = xs.astype(jnp.bfloat16).astype(jnp.float32)
        w = w_oihw.astype(jnp.bfloat16).astype(jnp.float32)
        return lax.conv_general_dilated(
            xs, w, window_strides=(1, 1), padding=[(d, d), (d, d)],
            rhs_dilation=(d, d), dimension_numbers=("NCHW", "OIHW", "NCHW"))

    def bnrelu(y, g, b, m, v):
        s = g / jnp.sqrt(v + eps)
        return jnp.maximum(y * s[None, :, None, None]
                           + (b - m * s)[None, :, None, None], 0.0)

    x1, x2 = jnp.split(x, 2, axis=1)
    p1 = bnrelu(conv(x1, raw["w1_oihw"], 1), *raw["bn1"])
    p2 = bnrelu(conv(x2, raw["w2_oihw"], 2), *raw["bn2"])
    s = p1 + p2
    pooled = jnp.mean(s, axis=(2, 3))                       # (B, COUT)
    z = pooled @ raw["wr_mat"]                              # (B, A)
    g, b, m, v = raw["bn_r"]
    sc = g / jnp.sqrt(v + eps)
    z = jnp.maximum(z * sc[None, :] + (b - m * sc)[None, :], 0.0)
    logits = z @ raw["ws_mat"]                              # (B, 2*COUT)
    Bv, C = pooled.shape
    a = jax.nn.softmax(logits.reshape(Bv, 2, C), axis=1)
    return (a[:, 0, :, None, None] * p1 + a[:, 1, :, None, None] * p2)


# ----------------------------------- main -----------------------------------
if __name__ == "__main__":
    B, CIN, H, W = 2, 16, 16, 16
    COUT = CIN
    CIN2 = CIN // 2
    A = make_divisible(COUT * (1.0 / 16), divisor=8)   # attn_channels = 8
    eps = 1e-5

    key = jax.random.PRNGKey(0)
    ks = jax.random.split(key, 8)

    x = jax.random.normal(ks[0], (B, CIN, H, W), jnp.float32)

    # path conv weights (PyTorch OIHW: (COUT, CIN2, 3, 3)), bias=False
    w1_oihw = jax.random.normal(ks[1], (COUT, CIN2, 3, 3), jnp.float32) * 0.1
    w2_oihw = jax.random.normal(ks[2], (COUT, CIN2, 3, 3), jnp.float32) * 0.1

    def bn_params(k, c):
        k1, k2, k3, k4 = jax.random.split(k, 4)
        gamma = jax.random.uniform(k1, (c,), jnp.float32, 0.5, 1.5)
        beta = jax.random.normal(k2, (c,), jnp.float32) * 0.1
        mean = jax.random.normal(k3, (c,), jnp.float32) * 0.1
        var = jax.random.uniform(k4, (c,), jnp.float32, 0.5, 1.5)
        return gamma, beta, mean, var

    bn1 = bn_params(ks[3], COUT)
    bn2 = bn_params(ks[4], COUT)
    bn_r = bn_params(ks[5], A)

    # attention 1x1 convs (bias=False)
    wr_oihw = jax.random.normal(ks[6], (A, COUT, 1, 1), jnp.float32) * 0.2
    ws_oihw = jax.random.normal(ks[7], (2 * COUT, A, 1, 1), jnp.float32) * 0.2

    def fold_bn(gamma, beta, mean, var):
        s = gamma / jnp.sqrt(var + eps)
        return s, beta - mean * s

    # transposed block-diagonal fused conv weight: row = conv output channel
    # (path-1 channels then path-2), column order = (path, kh, kw, cin) matching
    # the kernel's im2col^T row order.
    K1 = 9 * CIN2
    w1_t = jnp.transpose(w1_oihw, (0, 2, 3, 1)).reshape(COUT, K1)
    w2_t = jnp.transpose(w2_oihw, (0, 2, 3, 1)).reshape(COUT, K1)
    w_fused_t = jnp.zeros((2 * COUT, 2 * K1), jnp.float32)
    w_fused_t = w_fused_t.at[:COUT, :K1].set(w1_t)
    w_fused_t = w_fused_t.at[COUT:, K1:].set(w2_t)
    w_fused_t = w_fused_t.astype(jnp.bfloat16)

    s1, b1 = fold_bn(*bn1)
    s2, b2 = fold_bn(*bn2)
    sr, br = fold_bn(*bn_r)

    params = {
        "w_fused_t": w_fused_t,                                      # (32, 144) bf16
        "sb_fused": jnp.stack([jnp.concatenate([s1, s2]),
                               jnp.concatenate([b1, b2])], axis=1),  # (32, 2)
        "w_reduce_t": wr_oihw[:, :, 0, 0].T,                         # (COUT, A)
        "sb_reduce": jnp.stack([sr, br], axis=0),                    # (2, A)
        "w_select": ws_oihw[:, :, 0, 0],                             # (2*COUT, A)
    }

    out = selective_kernel_forward(x, params)
    out = jax.block_until_ready(out)

    raw = {"w1_oihw": w1_oihw, "w2_oihw": w2_oihw, "bn1": bn1, "bn2": bn2,
           "bn_r": bn_r, "wr_mat": wr_oihw[:, :, 0, 0].T,
           "ws_mat": ws_oihw[:, :, 0, 0].T}
    ref = jax.block_until_ready(ref_forward(x, raw))

    assert out.shape == (B, COUT, H, W)
    assert jnp.allclose(out, ref, rtol=5e-3, atol=2e-3), (
        float(jnp.max(jnp.abs(out - ref))))

    print("KERNEL_OK")
</pallas_src>

<mosaic_0001>
module attributes {stable_mosaic.version = 11 : i64} {
  func.func @_sk_kernel(%arg0: i32, %arg1: memref<1x8x420xbf16, #tpu.memory_space<vmem>>, %arg2: memref<1x8x420xbf16, #tpu.memory_space<vmem>>, %arg3: memref<32x144xbf16, #tpu.memory_space<vmem>>, %arg4: memref<32x2xf32, #tpu.memory_space<vmem>>, %arg5: memref<16x8xf32, #tpu.memory_space<vmem>>, %arg6: memref<2x8xf32, #tpu.memory_space<vmem>>, %arg7: memref<32x8xf32, #tpu.memory_space<vmem>>, %arg8: memref<1x320xf32, #tpu.memory_space<vmem>>, %arg9: memref<1x16x320xf32, #tpu.memory_space<vmem>>, %arg10: memref<144x320xbf16, #tpu.memory_space<vmem>>) attributes {dimension_semantics = [#tpu.dimension_semantics<parallel>], iteration_bounds = array<i64: 2>, scalar_prefetch = 0 : i64, scratch_operands = 1 : i64, tpu.core_type = #tpu.core_type<tc>, window_params = [{transform_indices = @transform_0, window_bounds = array<i64: 1, 8, 420>}, {transform_indices = @transform_1, window_bounds = array<i64: 1, 8, 420>}, {pipeline_mode = #tpu.pipeline_mode<synchronous>, transform_indices = @transform_2, window_bounds = array<i64: 32, 144>}, {pipeline_mode = #tpu.pipeline_mode<synchronous>, transform_indices = @transform_3, window_bounds = array<i64: 32, 2>}, {pipeline_mode = #tpu.pipeline_mode<synchronous>, transform_indices = @transform_4, window_bounds = array<i64: 16, 8>}, {pipeline_mode = #tpu.pipeline_mode<synchronous>, transform_indices = @transform_5, window_bounds = array<i64: 2, 8>}, {pipeline_mode = #tpu.pipeline_mode<synchronous>, transform_indices = @transform_6, window_bounds = array<i64: 32, 8>}, {pipeline_mode = #tpu.pipeline_mode<synchronous>, transform_indices = @transform_7, window_bounds = array<i64: 1, 320>}, {transform_indices = @transform_8, window_bounds = array<i64: 1, 16, 320>}]} {
    %c0 = arith.constant 0 : index
    %c0_0 = arith.constant 0 : index
    %c21 = arith.constant 21 : index
    %0 = vector.load %arg1[%c0, %c0_0, %c21] : memref<1x8x420xbf16, #tpu.memory_space<vmem>>, vector<1x8x320xbf16>
    %1 = vector.shape_cast %0 : vector<1x8x320xbf16> to vector<8x320xbf16>
    %c0_1 = arith.constant 0 : index
    %c0_2 = arith.constant 0 : index
    %2 = vector.load %arg10[%c0_1, %c0_2] : memref<144x320xbf16, #tpu.memory_space<vmem>>, vector<8x320xbf16>
    tpu.vector_store %arg10[%c0_1, %c0_2], %1 {strides = array<i32>} : memref<144x320xbf16, #tpu.memory_space<vmem>>, vector<8x320xbf16>,
    %c0_3 = arith.constant 0 : index
    %c0_4 = arith.constant 0 : index
    %c22 = arith.constant 22 : index
    %3 = vector.load %arg1[%c0_3, %c0_4, %c22] : memref<1x8x420xbf16, #tpu.memory_space<vmem>>, vector<1x8x320xbf16>
    %4 = vector.shape_cast %3 : vector<1x8x320xbf16> to vector<8x320xbf16>
    %c8 = arith.constant 8 : index
    %c0_5 = arith.constant 0 : index
    %5 = vector.load %arg10[%c8, %c0_5] : memref<144x320xbf16, #tpu.memory_space<vmem>>, vector<8x320xbf16>
    tpu.vector_store %arg10[%c8, %c0_5], %4 {strides = array<i32>} : memref<144x320xbf16, #tpu.memory_space<vmem>>, vector<8x320xbf16>,
    %c0_6 = arith.constant 0 : index
    %c0_7 = arith.constant 0 : index
    %c23 = arith.constant 23 : index
    %6 = vector.load %arg1[%c0_6, %c0_7, %c23] : memref<1x8x420xbf16, #tpu.memory_space<vmem>>, vector<1x8x320xbf16>
    %7 = vector.shape_cast %6 : vector<1x8x320xbf16> to vector<8x320xbf16>
    %c16 = arith.constant 16 : index
    %c0_8 = arith.constant 0 : index
    %8 = vector.load %arg10[%c16, %c0_8] : memref<144x320xbf16, #tpu.memory_space<vmem>>, vector<8x320xbf16>
    tpu.vector_store %arg10[%c16, %c0_8], %7 {strides = array<i32>} : memref<144x320xbf16, #tpu.memory_space<vmem>>, vector<8x320xbf16>,
    %c0_9 = arith.constant 0 : index
    %c0_10 = arith.constant 0 : index
    %c41 = arith.constant 41 : index
    %9 = vector.load %arg1[%c0_9, %c0_10, %c41] : memref<1x8x420xbf16, #tpu.memory_space<vmem>>, vector<1x8x320xbf16>
    %10 = vector.shape_cast %9 : vector<1x8x320xbf16> to vector<8x320xbf16>
    %c24 = arith.constant 24 : index
    %c0_11 = arith.constant 0 : index
    %11 = vector.load %arg10[%c24, %c0_11] : memref<144x320xbf16, #tpu.memory_space<vmem>>, vector<8x320xbf16>
    tpu.vector_store %arg10[%c24, %c0_11], %10 {strides = array<i32>} : memref<144x320xbf16, #tpu.memory_space<vmem>>, vector<8x320xbf16>,
    %c0_12 = arith.constant 0 : index
    %c0_13 = arith.constant 0 : index
    %c42 = arith.constant 42 : index
    %12 = vector.load %arg1[%c0_12, %c0_13, %c42] : memref<1x8x420xbf16, #tpu.memory_space<vmem>>, vector<1x8x320xbf16>
    %13 = vector.shape_cast %12 : vector<1x8x320xbf16> to vector<8x320xbf16>
    %c32 = arith.constant 32 : index
    %c0_14 = arith.constant 0 : index
    %14 = vector.load %arg10[%c32, %c0_14] : memref<144x320xbf16, #tpu.memory_space<vmem>>, vector<8x320xbf16>
    tpu.vector_store %arg10[%c32, %c0_14], %13 {strides = array<i32>} : memref<144x320xbf16, #tpu.memory_space<vmem>>, vector<8x320xbf16>,
    %c0_15 = arith.constant 0 : index
    %c0_16 = arith.constant 0 : index
    %c43 = arith.constant 43 : index
    %15 = vector.load %arg1[%c0_15, %c0_16, %c43] : memref<1x8x420xbf16, #tpu.memory_space<vmem>>, vector<1x8x320xbf16>
    %16 = vector.shape_cast %15 : vector<1x8x320xbf16> to vector<8x320xbf16>
    %c40 = arith.constant 40 : index
    %c0_17 = arith.constant 0 : index
    %17 = vector.load %arg10[%c40, %c0_17] : memref<144x320xbf16, #tpu.memory_space<vmem>>, vector<8x320xbf16>
    tpu.vector_store %arg10[%c40, %c0_17], %16 {strides = array<i32>} : memref<144x320xbf16, #tpu.memory_space<vmem>>, vector<8x320xbf16>,
    %c0_18 = arith.constant 0 : index
    %c0_19 = arith.constant 0 : index
    %c61 = arith.constant 61 : index
    %18 = vector.load %arg1[%c0_18, %c0_19, %c61] : memref<1x8x420xbf16, #tpu.memory_space<vmem>>, vector<1x8x320xbf16>
    %19 = vector.shape_cast %18 : vector<1x8x320xbf16> to vector<8x320xbf16>
    %c48 = arith.constant 48 : index
    %c0_20 = arith.constant 0 : index
    %20 = vector.load %arg10[%c48, %c0_20] : memref<144x320xbf16, #tpu.memory_space<vmem>>, vector<8x320xbf16>
    tpu.vector_store %arg10[%c48, %c0_20], %19 {strides = array<i32>} : memref<144x320xbf16, #tpu.memory_space<vmem>>, vector<8x320xbf16>,
    %c0_21 = arith.constant 0 : index
    %c0_22 = arith.constant 0 : index
    %c62 = arith.constant 62 : index
    %21 = vector.load %arg1[%c0_21, %c0_22, %c62] : memref<1x8x420xbf16, #tpu.memory_space<vmem>>, vector<1x8x320xbf16>
    %22 = vector.shape_cast %21 : vector<1x8x320xbf16> to vector<8x320xbf16>
    %c56 = arith.constant 56 : index
    %c0_23 = arith.constant 0 : index
    %23 = vector.load %arg10[%c56, %c0_23] : memref<144x320xbf16, #tpu.memory_space<vmem>>, vector<8x320xbf16>
    tpu.vector_store %arg10[%c56, %c0_23], %22 {strides = array<i32>} : memref<144x320xbf16, #tpu.memory_space<vmem>>, vector<8x320xbf16>,
    %c0_24 = arith.constant 0 : index
    %c0_25 = arith.constant 0 : index
    %c63 = arith.constant 63 : index
    %24 = vector.load %arg1[%c0_24, %c0_25, %c63] : memref<1x8x420xbf16, #tpu.memory_space<vmem>>, vector<1x8x320xbf16>
    %25 = vector.shape_cast %24 : vector<1x8x320xbf16> to vector<8x320xbf16>
    %c64 = arith.constant 64 : index
    %c0_26 = arith.constant 0 : index
    %26 = vector.load %arg10[%c64, %c0_26] : memref<144x320xbf16, #tpu.memory_space<vmem>>, vector<8x320xbf16>
    tpu.vector_store %arg10[%c64, %c0_26], %25 {strides = array<i32>} : memref<144x320xbf16, #tpu.memory_space<vmem>>, vector<8x320xbf16>,
    %c0_27 = arith.constant 0 : index
    %c0_28 = arith.constant 0 : index
    %c0_29 = arith.constant 0 : index
    %27 = vector.load %arg2[%c0_27, %c0_28, %c0_29] : memref<1x8x420xbf16, #tpu.memory_space<vmem>>, vector<1x8x320xbf16>
    %28 = vector.shape_cast %27 : vector<1x8x320xbf16> to vector<8x320xbf16>
    %c72 = arith.constant 72 : index
    %c0_30 = arith.constant 0 : index
    %29 = vector.load %arg10[%c72, %c0_30] : memref<144x320xbf16, #tpu.memory_space<vmem>>, vector<8x320xbf16>
    tpu.vector_store %arg10[%c72, %c0_30], %28 {strides = array<i32>} : memref<144x320xbf16, #tpu.memory_space<vmem>>, vector<8x320xbf16>,
    %c0_31 = arith.constant 0 : index
    %c0_32 = arith.constant 0 : index
    %c2 = arith.constant 2 : index
    %30 = vector.load %arg2[%c0_31, %c0_32, %c2] : memref<1x8x420xbf16, #tpu.memory_space<vmem>>, vector<1x8x320xbf16>
    %31 = vector.shape_cast %30 : vector<1x8x320xbf16> to vector<8x320xbf16>
    %c80 = arith.constant 80 : index
    %c0_33 = arith.constant 0 : index
    %32 = vector.load %arg10[%c80, %c0_33] : memref<144x320xbf16, #tpu.memory_space<vmem>>, vector<8x320xbf16>
    tpu.vector_store %arg10[%c80, %c0_33], %31 {strides = array<i32>} : memref<144x320xbf16, #tpu.memory_space<vmem>>, vector<8x320xbf16>,
    %c0_34 = arith.constant 0 : index
    %c0_35 = arith.constant 0 : index
    %c4 = arith.constant 4 : index
    %33 = vector.load %arg2[%c0_34, %c0_35, %c4] : memref<1x8x420xbf16, #tpu.memory_space<vmem>>, vector<1x8x320xbf16>
    %34 = vector.shape_cast %33 : vector<1x8x320xbf16> to vector<8x320xbf16>
    %c88 = arith.constant 88 : index
    %c0_36 = arith.constant 0 : index
    %35 = vector.load %arg10[%c88, %c0_36] : memref<144x320xbf16, #tpu.memory_space<vmem>>, vector<8x320xbf16>
    tpu.vector_store %arg10[%c88, %c0_36], %34 {strides = array<i32>} : memref<144x320xbf16, #tpu.memory_space<vmem>>, vector<8x320xbf16>,
    %c0_37 = arith.constant 0 : index
    %c0_38 = arith.constant 0 : index
    %c40_39 = arith.constant 40 : index
    %36 = vector.load %arg2[%c0_37, %c0_38, %c40_39] : memref<1x8x420xbf16, #tpu.memory_space<vmem>>, vector<1x8x320xbf16>
    %37 = vector.shape_cast %36 : vector<1x8x320xbf16> to vector<8x320xbf16>
    %c96 = arith.constant 96 : index
    %c0_40 = arith.constant 0 : index
    %38 = vector.load %arg10[%c96, %c0_40] : memref<144x320xbf16, #tpu.memory_space<vmem>>, vector<8x320xbf16>
    tpu.vector_store %arg10[%c96, %c0_40], %37 {strides = array<i32>} : memref<144x320xbf16, #tpu.memory_space<vmem>>, vector<8x320xbf16>,
    %c0_41 = arith.constant 0 : index
    %c0_42 = arith.constant 0 : index
    %c42_43 = arith.constant 42 : index
    %39 = vector.load %arg2[%c0_41, %c0_42, %c42_43] : memref<1x8x420xbf16, #tpu.memory_space<vmem>>, vector<1x8x320xbf16>
    %40 = vector.shape_cast %39 : vector<1x8x320xbf16> to vector<8x320xbf16>
    %c104 = arith.constant 104 : index
    %c0_44 = arith.constant 0 : index
    %41 = vector.load %arg10[%c104, %c0_44] : memref<144x320xbf16, #tpu.memory_space<vmem>>, vector<8x320xbf16>
    tpu.vector_store %arg10[%c104, %c0_44], %40 {strides = array<i32>} : memref<144x320xbf16, #tpu.memory_space<vmem>>, vector<8x320xbf16>,
    %c0_45 = arith.constant 0 : index
    %c0_46 = arith.constant 0 : index
    %c44 = arith.constant 44 : index
    %42 = vector.load %arg2[%c0_45, %c0_46, %c44] : memref<1x8x420xbf16, #tpu.memory_space<vmem>>, vector<1x8x320xbf16>
    %43 = vector.shape_cast %42 : vector<1x8x320xbf16> to vector<8x320xbf16>
    %c112 = arith.constant 112 : index
    %c0_47 = arith.constant 0 : index
    %44 = vector.load %arg10[%c112, %c0_47] : memref<144x320xbf16, #tpu.memory_space<vmem>>, vector<8x320xbf16>
    tpu.vector_store %arg10[%c112, %c0_47], %43 {strides = array<i32>} : memref<144x320xbf16, #tpu.memory_space<vmem>>, vector<8x320xbf16>,
    %c0_48 = arith.constant 0 : index
    %c0_49 = arith.constant 0 : index
    %c80_50 = arith.constant 80 : index
    %45 = vector.load %arg2[%c0_48, %c0_49, %c80_50] : memref<1x8x420xbf16, #tpu.memory_space<vmem>>, vector<1x8x320xbf16>
    %46 = vector.shape_cast %45 : vector<1x8x320xbf16> to vector<8x320xbf16>
    %c120 = arith.constant 120 : index
    %c0_51 = arith.constant 0 : index
    %47 = vector.load %arg10[%c120, %c0_51] : memref<144x320xbf16, #tpu.memory_space<vmem>>, vector<8x320xbf16>
    tpu.vector_store %arg10[%c120, %c0_51], %46 {strides = array<i32>} : memref<144x320xbf16, #tpu.memory_space<vmem>>, vector<8x320xbf16>,
    %c0_52 = arith.constant 0 : index
    %c0_53 = arith.constant 0 : index
    %c82 = arith.constant 82 : index
    %48 = vector.load %arg2[%c0_52, %c0_53, %c82] : memref<1x8x420xbf16, #tpu.memory_space<vmem>>, vector<1x8x320xbf16>
    %49 = vector.shape_cast %48 : vector<1x8x320xbf16> to vector<8x320xbf16>
    %c128 = arith.constant 128 : index
    %c0_54 = arith.constant 0 : index
    %50 = vector.load %arg10[%c128, %c0_54] : memref<144x320xbf16, #tpu.memory_space<vmem>>, vector<8x320xbf16>
    tpu.vector_store %arg10[%c128, %c0_54], %49 {strides = array<i32>} : memref<144x320xbf16, #tpu.memory_space<vmem>>, vector<8x320xbf16>,
    %c0_55 = arith.constant 0 : index
    %c0_56 = arith.constant 0 : index
    %c84 = arith.constant 84 : index
    %51 = vector.load %arg2[%c0_55, %c0_56, %c84] : memref<1x8x420xbf16, #tpu.memory_space<vmem>>, vector<1x8x320xbf16>
    %52 = vector.shape_cast %51 : vector<1x8x320xbf16> to vector<8x320xbf16>
    %c136 = arith.constant 136 : index
    %c0_57 = arith.constant 0 : index
    %53 = vector.load %arg10[%c136, %c0_57] : memref<144x320xbf16, #tpu.memory_space<vmem>>, vector<8x320xbf16>
    tpu.vector_store %arg10[%c136, %c0_57], %52 {strides = array<i32>} : memref<144x320xbf16, #tpu.memory_space<vmem>>, vector<8x320xbf16>,
    %c0_58 = arith.constant 0 : index
    %c0_59 = arith.constant 0 : index
    %54 = vector.load %arg3[%c0_58, %c0_59] : memref<32x144xbf16, #tpu.memory_space<vmem>>, vector<32x144xbf16>
    %c0_60 = arith.constant 0 : index
    %c0_61 = arith.constant 0 : index
    %55 = vector.load %arg10[%c0_60, %c0_61] : memref<144x320xbf16, #tpu.memory_space<vmem>>, vector<144x320xbf16>
    %cst = arith.constant dense<0.000000e+00> : vector<32x320xf32>
    %56 = tpu.matmul %54, %55, %cst {dimension_numbers = #tpu.dot_dimension_numbers<[1], [0], [0], [1], [0, 0, 1, 1], [], []>} : vector<32x144xbf16>, vector<144x320xbf16>, vector<32x320xf32> -> vector<32x320xf32>
    %c0_62 = arith.constant 0 : index
    %c0_63 = arith.constant 0 : index
    %57 = vector.load %arg4[%c0_62, %c0_63] : memref<32x2xf32, #tpu.memory_space<vmem>>, vector<32x1xf32>
    %58 = vector.broadcast %57 : vector<32x1xf32> to vector<32x320xf32>
    %59 = arith.mulf %56, %58 : vector<32x320xf32>
    %c0_64 = arith.constant 0 : index
    %c1 = arith.constant 1 : index
    %60 = vector.load %arg4[%c0_64, %c1] : memref<32x2xf32, #tpu.memory_space<vmem>>, vector<32x1xf32>
    %61 = vector.broadcast %60 : vector<32x1xf32> to vector<32x320xf32>
    %62 = arith.addf %59, %61 : vector<32x320xf32>
    %cst_65 = arith.constant 0.000000e+00 : f32
    %63 = vector.broadcast %cst_65 : f32 to vector<32x320xf32>
    %64 = arith.maximumf %62, %63 : vector<32x320xf32>
    %c0_66 = arith.constant 0 : index
    %c0_67 = arith.constant 0 : index
    %65 = vector.load %arg8[%c0_66, %c0_67] : memref<1x320xf32, #tpu.memory_space<vmem>>, vector<1x320xf32>
    %66 = vector.broadcast %65 : vector<1x320xf32> to vector<32x320xf32>
    %67 = arith.mulf %64, %66 : vector<32x320xf32>
    %cst_68 = arith.constant dense<0.000000e+00> : vector<32xf32>
    %68 = vector.multi_reduction <add>, %67, %cst_68 [1] : vector<32x320xf32> to vector<32xf32>
    %69 = vector.shape_cast %68 : vector<32xf32> to vector<32x1xf32>
    %cst_69 = arith.constant 3.906250e-03 : f32
    %70 = vector.broadcast %cst_69 : f32 to vector<32x1xf32>
    %71 = arith.mulf %69, %70 : vector<32x1xf32>
    %72 = vector.extract_strided_slice %71 {offsets = [0, 0], sizes = [16, 1], strides = [1, 1]} : vector<32x1xf32> to vector<16x1xf32>
    %73 = vector.extract_strided_slice %71 {offsets = [16, 0], sizes = [16, 1], strides = [1, 1]} : vector<32x1xf32> to vector<16x1xf32>
    %74 = arith.addf %72, %73 : vector<16x1xf32>
    %c0_70 = arith.constant 0 : index
    %c0_71 = arith.constant 0 : index
    %75 = vector.load %arg5[%c0_70, %c0_71] : memref<16x8xf32, #tpu.memory_space<vmem>>, vector<16x8xf32>
    %76 = vector.broadcast %74 : vector<16x1xf32> to vector<16x8xf32>
    %77 = arith.mulf %75, %76 : vector<16x8xf32>
    %cst_72 = arith.constant dense<0.000000e+00> : vector<8xf32>
    %78 = vector.multi_reduction <add>, %77, %cst_72 [0] : vector<16x8xf32> to vector<8xf32>
    %79 = vector.shape_cast %78 : vector<8xf32> to vector<1x8xf32>
    %c0_73 = arith.constant 0 : index
    %c0_74 = arith.constant 0 : index
    %80 = vector.load %arg6[%c0_73, %c0_74] : memref<2x8xf32, #tpu.memory_space<vmem>>, vector<1x8xf32>
    %81 = arith.mulf %79, %80 : vector<1x8xf32>
    %c1_75 = arith.constant 1 : index
    %c0_76 = arith.constant 0 : index
    %82 = vector.load %arg6[%c1_75, %c0_76] : memref<2x8xf32, #tpu.memory_space<vmem>>, vector<1x8xf32>
    %83 = arith.addf %81, %82 : vector<1x8xf32>
    %cst_77 = arith.constant 0.000000e+00 : f32
    %84 = vector.broadcast %cst_77 : f32 to vector<1x8xf32>
    %85 = arith.maximumf %83, %84 : vector<1x8xf32>
    %c0_78 = arith.constant 0 : index
    %c0_79 = arith.constant 0 : index
    %86 = vector.load %arg7[%c0_78, %c0_79] : memref<32x8xf32, #tpu.memory_space<vmem>>, vector<32x8xf32>
    %87 = vector.broadcast %85 : vector<1x8xf32> to vector<32x8xf32>
    %88 = arith.mulf %86, %87 : vector<32x8xf32>
    %cst_80 = arith.constant dense<0.000000e+00> : vector<32xf32>
    %89 = vector.multi_reduction <add>, %88, %cst_80 [1] : vector<32x8xf32> to vector<32xf32>
    %90 = vector.shape_cast %89 : vector<32xf32> to vector<32x1xf32>
    %91 = vector.extract_strided_slice %90 {offsets = [0, 0], sizes = [16, 1], strides = [1, 1]} : vector<32x1xf32> to vector<16x1xf32>
    %92 = vector.extract_strided_slice %90 {offsets = [16, 0], sizes = [16, 1], strides = [1, 1]} : vector<32x1xf32> to vector<16x1xf32>
    %93 = arith.maximumf %91, %92 : vector<16x1xf32>
    %94 = arith.subf %91, %93 : vector<16x1xf32>
    %95 = math.exp %94 : vector<16x1xf32>
    %96 = arith.subf %92, %93 : vector<16x1xf32>
    %97 = math.exp %96 : vector<16x1xf32>
    %98 = arith.addf %95, %97 : vector<16x1xf32>
    %99 = tpu.reciprocal %98 {approx = true} : vector<16x1xf32> -> vector<16x1xf32>
    %100 = arith.mulf %95, %99 : vector<16x1xf32>
    %cst_81 = arith.constant 1.000000e+00 : f32
    %101 = vector.broadcast %cst_81 : f32 to vector<16x1xf32>
    %102 = arith.subf %101, %100 : vector<16x1xf32>
    %103 = vector.extract_strided_slice %64 {offsets = [0, 0], sizes = [16, 320], strides = [1, 1]} : vector<32x320xf32> to vector<16x320xf32>
    %104 = vector.broadcast %100 : vector<16x1xf32> to vector<16x320xf32>
    %105 = arith.mulf %104, %103 : vector<16x320xf32>
    %106 = vector.extract_strided_slice %64 {offsets = [16, 0], sizes = [16, 320], strides = [1, 1]} : vector<32x320xf32> to vector<16x320xf32>
    %107 = vector.broadcast %102 : vector<16x1xf32> to vector<16x320xf32>
    %108 = arith.mulf %107, %106 : vector<16x320xf32>
    %109 = arith.addf %105, %108 : vector<16x320xf32>
    %c0_82 = arith.constant 0 : index
    %c0_83 = arith.constant 0 : index
    %c0_84 = arith.constant 0 : index
    %110 = vector.load %arg9[%c0_82, %c0_83, %c0_84] : memref<1x16x320xf32, #tpu.memory_space<vmem>>, vector<1x16x320xf32>
    %111 = vector.shape_cast %110 : vector<1x16x320xf32> to vector<16x320xf32>
    %112 = vector.shape_cast %109 : vector<16x320xf32> to vector<1x16x320xf32>
    tpu.vector_store %arg9[%c0_82, %c0_83, %c0_84], %112 {strides = array<i32>} : memref<1x16x320xf32, #tpu.memory_space<vmem>>, vector<1x16x320xf32>,
    return
  }
  func.func @transform_0(%arg0: i32) -> (i32, i32, i32) {
    %c0_i32 = arith.constant 0 : i32
    %c0_i32_0 = arith.constant 0 : i32
    %c0_i32_1 = arith.constant 0 : i32
    return %arg0, %c0_i32, %c0_i32_0 : i32, i32, i32
  }
  func.func @transform_1(%arg0: i32) -> (i32, i32, i32) {
    %c0_i32 = arith.constant 0 : i32
    %c0_i32_0 = arith.constant 0 : i32
    %c0_i32_1 = arith.constant 0 : i32
    return %arg0, %c0_i32, %c0_i32_0 : i32, i32, i32
  }
  func.func @transform_2(%arg0: i32) -> (i32, i32) {
    %c0_i32 = arith.constant 0 : i32
    %c0_i32_0 = arith.constant 0 : i32
    %c0_i32_1 = arith.constant 0 : i32
    return %c0_i32, %c0_i32_0 : i32, i32
  }
  func.func @transform_3(%arg0: i32) -> (i32, i32) {
    %c0_i32 = arith.constant 0 : i32
    %c0_i32_0 = arith.constant 0 : i32
    %c0_i32_1 = arith.constant 0 : i32
    return %c0_i32, %c0_i32_0 : i32, i32
  }
  func.func @transform_4(%arg0: i32) -> (i32, i32) {
    %c0_i32 = arith.constant 0 : i32
    %c0_i32_0 = arith.constant 0 : i32
    %c0_i32_1 = arith.constant 0 : i32
    return %c0_i32, %c0_i32_0 : i32, i32
  }
  func.func @transform_5(%arg0: i32) -> (i32, i32) {
    %c0_i32 = arith.constant 0 : i32
    %c0_i32_0 = arith.constant 0 : i32
    %c0_i32_1 = arith.constant 0 : i32
    return %c0_i32, %c0_i32_0 : i32, i32
  }
  func.func @transform_6(%arg0: i32) -> (i32, i32) {
    %c0_i32 = arith.constant 0 : i32
    %c0_i32_0 = arith.constant 0 : i32
    %c0_i32_1 = arith.constant 0 : i32
    return %c0_i32, %c0_i32_0 : i32, i32
  }
  func.func @transform_7(%arg0: i32) -> (i32, i32) {
    %c0_i32 = arith.constant 0 : i32
    %c0_i32_0 = arith.constant 0 : i32
    %c0_i32_1 = arith.constant 0 : i32
    return %c0_i32, %c0_i32_0 : i32, i32
  }
  func.func @transform_8(%arg0: i32) -> (i32, i32, i32) {
    %c0_i32 = arith.constant 0 : i32
    %c0_i32_0 = arith.constant 0 : i32
    %c0_i32_1 = arith.constant 0 : i32
    return %arg0, %c0_i32, %c0_i32_0 : i32, i32, i32
  }
}

</mosaic_0001>

<llo_original>
// kernel: tpu_custom_call.1
$region0: #{tpu_custom_call.1}
  #allocation0 [shape = 'u32[]', space=smem, size = 0x4, offset = 0x4, fixed_abs, tag = 'smem constant byte address 0x4 - core index']
  #allocation1 [shape = 'u32[144,128]{1,0:T(1,128)}', space=vmem, size = 0x12000, scoped, tag = 'internal scratch']
  #allocation2 [shape = 'bf16[144,320]{1,0:T(16,128)(2,1)}', space=vmem, size = 0x1b000, scoped, tag = 'scratch operand']
  %s0 = inlined_call_operand.vmem [shape: bf16[2,8,420], index: 0, kind: input, shape index: {}]
  %s1 = inlined_call_operand.vmem [shape: bf16[2,8,420], index: 1, kind: input, shape index: {}]
  %s2 = inlined_call_operand.vmem [shape: bf16[32,144], index: 2, kind: input, shape index: {}]
  %s3 = inlined_call_operand.vmem [shape: f32[32,2], index: 3, kind: input, shape index: {}]
  %s4 = inlined_call_operand.vmem [shape: f32[16,8], index: 4, kind: input, shape index: {}]
  %s5 = inlined_call_operand.hbm [shape: f32[2,8], index: 5, kind: input, shape index: {}]
  %s6 = inlined_call_operand.vmem [shape: f32[32,8], index: 6, kind: input, shape index: {}]
  %s7 = inlined_call_operand.vmem [shape: f32[1,320], index: 7, kind: input, shape index: {}]
  %s8 = inlined_call_operand.hbm [shape: f32[2,16,320], index: 8, kind: output, shape index: {}]
  %s9 = sld [smem:[#allocation0]]
  $region69: #{tpu_custom_call.1} parent=0
    _
  %s11 = ssub.s32 1, %s9
  %s12 = scalar_select 0, %s11, %s9
  $region1: #{tpu_custom_call.1} parent=0
    #allocation3 [shape = 'u8[1024]{0}', space=vmem, size = 0x400, scoped, tag = 'input window, operand 5, single buffered']
    #allocation4 [shape = 's32[2]{0}', space=sflag, size = 0x8, scoped, tag = 'scoped memory for tpu_custom_call.1']
    #allocation5 [shape = 's32[2]{0}', space=sflag, size = 0x8, scoped, tag = 'scoped memory for tpu_custom_call.1']
    #allocation6 [shape = 'u8[49152]{0}', space=vmem, size = 0xc000, scoped, tag = 'output window, operand 0']
    %13 = vsyncpa [#allocation4], 0
    %14 = vsyncpa [#allocation5], 0
    %s15 = scalar_lea.sflag [#allocation5], 1
    %16 = vsyncpa %s15, 0
    loop: start=0, step=1, limit=4
    $region2: #{tpu_custom_call.1} parent=1 // loop_pre_header
      _
    $region3: #{tpu_custom_call.1} parent=1 // loop_header
      %s18 = sphi 0, %s22
      %p19 = scmp.ge.s32.totalorder %s18, 4
      %s28 = sphi 0, %s30
      %s31 = sphi 0, %s28
      %s32 = sphi 0, %s31
      %s48 = sphi 0, %s32
      %s54 = sphi 0, %s56
      %s57 = sphi 0, %s54
      %s58 = sphi 0, %s57
      %s74 = sphi 0, %s58
      %s78 = sphi 0, %s78
      %s80 = sphi 0, %s78
      %s81 = sphi 0, %s80
      %s95 = sphi 0, %s81
      %s99 = sphi 0, %s99
      %s101 = sphi 0, %s99
      %s102 = sphi 0, %s101
      %s116 = sphi 0, %s102
      %s120 = sphi 0, %s120
      %s122 = sphi 0, %s120
      %s123 = sphi 0, %s122
      %s137 = sphi 0, %s123
      %s141 = sphi 0, %s141
      %s143 = sphi 0, %s141
      %s144 = sphi 0, %s143
      %s158 = sphi 0, %s144
      %s162 = sphi 0, %s162
      %s164 = sphi 0, %s162
      %s165 = sphi 0, %s164
      %s179 = sphi 0, %s165
      %s183 = sphi 0, %s183
      %s185 = sphi 0, %s183
      %s186 = sphi 0, %s185
      %s200 = sphi 0, %s186
      %s206 = sphi 0, %s208
      %s209 = sphi 0, %s206
      %s210 = sphi 0, %s209
      %s226 = sphi 0, %s210
    $region4: #{tpu_custom_call.1} parent=1 // loop_header_branch
      %21 = sbr.rel (%p19) target = $region8
    $region5: #{tpu_custom_call.1} parent=1 // loop_body
      %s23 = ssub.s32 %s18, 1
      %s24 = ssub.s32 %s18, 2
      %s25 = sadd.s32 %s18, 1
      %s26 = ssub.s32 %s18, %s25
      %p27 = scmp.eq.s32.totalorder %s26, 0
      %s29 = sadd.s32 %s28, 1
      %s30 = scalar_select %p27, %s28, %s29
      %p33 = pneg %p27
      %p34 = scmp.eq.s32.totalorder %s18, 1
      %p35 = por %p33, %p34
      %p36 = scmp.ne.s32.totalorder %s28, %s31
      %p37 = scmp.eq.s32.totalorder %s18, 0
      %p38 = por %p36, %p37
      %p39 = scmp.ne.s32.totalorder %s28, %s31
      %p40 = scmp.eq.s32.totalorder %s23, 1
      %p41 = por %p39, %p40
      %p42 = scmp.ne.s32.totalorder %s31, %s32
      %p43 = scmp.eq.s32.totalorder %s23, 0
      %p44 = por %p42, %p43
      %p45 = scmp.ne.s32.totalorder %s31, %s32
      %p46 = scmp.eq.s32.totalorder %s24, 1
      %p47 = por %p45, %p46
      %p49 = scmp.ne.s32.totalorder %s32, %s48
      %p50 = scmp.eq.s32.totalorder %s24, 0
      %p51 = por %p49, %p50
      %s52 = ssub.s32 %s18, %s25
      %p53 = scmp.eq.s32.totalorder %s52, 0
      %s55 = sadd.s32 %s54, 1
      %s56 = scalar_select %p53, %s54, %s55
      %p59 = pneg %p53
      %p60 = scmp.eq.s32.totalorder %s18, 1
      %p61 = por %p59, %p60
      %p62 = scmp.ne.s32.totalorder %s54, %s57
      %p63 = scmp.eq.s32.totalorder %s18, 0
      %p64 = por %p62, %p63
      %p65 = scmp.ne.s32.totalorder %s54, %s57
      %p66 = scmp.eq.s32.totalorder %s23, 1
      %p67 = por %p65, %p66
      %p68 = scmp.ne.s32.totalorder %s57, %s58
      %p69 = scmp.eq.s32.totalorder %s23, 0
      %p70 = por %p68, %p69
      %p71 = scmp.ne.s32.totalorder %s57, %s58
      %p72 = scmp.eq.s32.totalorder %s24, 1
      %p73 = por %p71, %p72
      %p75 = scmp.ne.s32.totalorder %s58, %s74
      %p76 = scmp.eq.s32.totalorder %s24, 0
      %p77 = por %p75, %p76
      %s79 = sadd.s32 %s78, 1
      %p82 = scmp.eq.s32.totalorder %s18, 1
      %p83 = scmp.ne.s32.totalorder %s78, %s80
      %p84 = scmp.eq.s32.totalorder %s18, 0
      %p85 = por %p83, %p84
      %p86 = scmp.ne.s32.totalorder %s78, %s80
      %p87 = scmp.eq.s32.totalorder %s23, 1
      %p88 = por %p86, %p87
      %p89 = scmp.ne.s32.totalorder %s80, %s81
      %p90 = scmp.eq.s32.totalorder %s23, 0
      %p91 = por %p89, %p90
      %p92 = scmp.ne.s32.totalorder %s80, %s81
      %p93 = scmp.eq.s32.totalorder %s24, 1
      %p94 = por %p92, %p93
      %p96 = scmp.ne.s32.totalorder %s81, %s95
      %p97 = scmp.eq.s32.totalorder %s24, 0
      %p98 = por %p96, %p97
      %s100 = sadd.s32 %s99, 1
      %p103 = scmp.eq.s32.totalorder %s18, 1
      %p104 = scmp.ne.s32.totalorder %s99, %s101
      %p105 = scmp.eq.s32.totalorder %s18, 0
      %p106 = por %p104, %p105
      %p107 = scmp.ne.s32.totalorder %s99, %s101
      %p108 = scmp.eq.s32.totalorder %s23, 1
      %p109 = por %p107, %p108
      %p110 = scmp.ne.s32.totalorder %s101, %s102
      %p111 = scmp.eq.s32.totalorder %s23, 0
      %p112 = por %p110, %p111
      %p113 = scmp.ne.s32.totalorder %s101, %s102
      %p114 = scmp.eq.s32.totalorder %s24, 1
      %p115 = por %p113, %p114
      %p117 = scmp.ne.s32.totalorder %s102, %s116
      %p118 = scmp.eq.s32.totalorder %s24, 0
      %p119 = por %p117, %p118
      %s121 = sadd.s32 %s120, 1
      %p124 = scmp.eq.s32.totalorder %s18, 1
      %p125 = scmp.ne.s32.totalorder %s120, %s122
      %p126 = scmp.eq.s32.totalorder %s18, 0
      %p127 = por %p125, %p126
      %p128 = scmp.ne.s32.totalorder %s120, %s122
      %p129 = scmp.eq.s32.totalorder %s23, 1
      %p130 = por %p128, %p129
      %p131 = scmp.ne.s32.totalorder %s122, %s123
      %p132 = scmp.eq.s32.totalorder %s23, 0
      %p133 = por %p131, %p132
      %p134 = scmp.ne.s32.totalorder %s122, %s123
      %p135 = scmp.eq.s32.totalorder %s24, 1
      %p136 = por %p134, %p135
      %p138 = scmp.ne.s32.totalorder %s123, %s137
      %p139 = scmp.eq.s32.totalorder %s24, 0
      %p140 = por %p138, %p139
      %s142 = sadd.s32 %s141, 1
      %p145 = scmp.eq.s32.totalorder %s18, 1
      %p146 = scmp.ne.s32.totalorder %s141, %s143
      %p147 = scmp.eq.s32.totalorder %s18, 0
      %p148 = por %p146, %p147
      %p149 = scmp.ne.s32.totalorder %s141, %s143
      %p150 = scmp.eq.s32.totalorder %s23, 1
      %p151 = por %p149, %p150
      %p152 = scmp.ne.s32.totalorder %s143, %s144
      %p153 = scmp.eq.s32.totalorder %s23, 0
      %p154 = por %p152, %p153
      %p155 = scmp.ne.s32.totalorder %s143, %s144
      %p156 = scmp.eq.s32.totalorder %s24, 1
      %p157 = por %p155, %p156
      %p159 = scmp.ne.s32.totalorder %s144, %s158
      %p160 = scmp.eq.s32.totalorder %s24, 0
      %p161 = por %p159, %p160
      %s163 = sadd.s32 %s162, 1
      %p166 = scmp.eq.s32.totalorder %s18, 1
      %p167 = scmp.ne.s32.totalorder %s162, %s164
      %p168 = scmp.eq.s32.totalorder %s18, 0
      %p169 = por %p167, %p168
      %p170 = scmp.ne.s32.totalorder %s162, %s164
      %p171 = scmp.eq.s32.totalorder %s23, 1
      %p172 = por %p170, %p171
      %p173 = scmp.ne.s32.totalorder %s164, %s165
      %p174 = scmp.eq.s32.totalorder %s23, 0
      %p175 = por %p173, %p174
      %p176 = scmp.ne.s32.totalorder %s164, %s165
      %p177 = scmp.eq.s32.totalorder %s24, 1
      %p178 = por %p176, %p177
      %p180 = scmp.ne.s32.totalorder %s165, %s179
      %p181 = scmp.eq.s32.totalorder %s24, 0
      %p182 = por %p180, %p181
      %s184 = sadd.s32 %s183, 1
      %p187 = scmp.eq.s32.totalorder %s18, 1
      %p188 = scmp.ne.s32.totalorder %s183, %s185
      %p189 = scmp.eq.s32.totalorder %s18, 0
      %p190 = por %p188, %p189
      %p191 = scmp.ne.s32.totalorder %s183, %s185
      %p192 = scmp.eq.s32.totalorder %s23, 1
      %p193 = por %p191, %p192
      %p194 = scmp.ne.s32.totalorder %s185, %s186
      %p195 = scmp.eq.s32.totalorder %s23, 0
      %p196 = por %p194, %p195
      %p197 = scmp.ne.s32.totalorder %s185, %s186
      %p198 = scmp.eq.s32.totalorder %s24, 1
      %p199 = por %p197, %p198
      %p201 = scmp.ne.s32.totalorder %s186, %s200
      %p202 = scmp.eq.s32.totalorder %s24, 0
      %p203 = por %p201, %p202
      %s204 = ssub.s32 %s18, %s25
      %p205 = scmp.eq.s32.totalorder %s204, 0
      %s207 = sadd.s32 %s206, 1
      %s208 = scalar_select %p205, %s206, %s207
      %p211 = pneg %p205
      %p212 = scmp.eq.s32.totalorder %s18, 1
      %p213 = por %p211, %p212
      %p214 = scmp.ne.s32.totalorder %s206, %s209
      %p215 = scmp.eq.s32.totalorder %s18, 0
      %p216 = por %p214, %p215
      %p217 = scmp.ne.s32.totalorder %s206, %s209
      %p218 = scmp.eq.s32.totalorder %s23, 1
      %p219 = por %p217, %p218
      %p220 = scmp.ne.s32.totalorder %s209, %s210
      %p221 = scmp.eq.s32.totalorder %s23, 0
      %p222 = por %p220, %p221
      %p223 = scmp.ne.s32.totalorder %s209, %s210
      %p224 = scmp.eq.s32.totalorder %s24, 1
      %p225 = por %p223, %p224
      %p227 = scmp.ne.s32.totalorder %s210, %s226
      %p228 = scmp.eq.s32.totalorder %s24, 0
      %p229 = por %p227, %p228
      %p230 = scmp.le.s32.totalorder 1, %s18
      %p231 = scmp.lt.s32.totalorder %s18, 3
      %p232 = pnand %p230, %p231
      %p233 = pneg %p232
      // Predicated region
      $region9: #{tpu_custom_call.1} parent=5 // pred_check
        _
      $region10: #{tpu_custom_call.1} parent=5 // pred_check_branch
        %235 = sbr.rel (%p232) target = $region12
      $region11: #{tpu_custom_call.1} parent=5 // pred_region
        %s236 = ssub.s32 %s18, 1
        // Predicated region
        $region13: #{tpu_custom_call.1} parent=11 // pred_check
          %p237 = pneg %p91
        $region14: #{tpu_custom_call.1} parent=11 // pred_check_branch
          %239 = sbr.rel (%p237) target = $region16
        $region15: #{tpu_custom_call.1} parent=11 // pred_region
          _
        $region16: #{tpu_custom_call.1} parent=11 // pred_fallthru
          _
        // Predicated region
        $region17: #{tpu_custom_call.1} parent=11 // pred_check
          %p240 = pneg %p112
        $region18: #{tpu_custom_call.1} parent=11 // pred_check_branch
          %242 = sbr.rel (%p240) target = $region20
        $region19: #{tpu_custom_call.1} parent=11 // pred_region
          _
        $region20: #{tpu_custom_call.1} parent=11 // pred_fallthru
          _
        // Predicated region
        $region21: #{tpu_custom_call.1} parent=11 // pred_check
          %p243 = pneg %p133
        $region22: #{tpu_custom_call.1} parent=11 // pred_check_branch
          %245 = sbr.rel (%p243) target = $region24
        $region23: #{tpu_custom_call.1} parent=11 // pred_region
          _
        $region24: #{tpu_custom_call.1} parent=11 // pred_fallthru
          _
        // Predicated region
        $region25: #{tpu_custom_call.1} parent=11 // pred_check
          %p246 = pneg %p154
        $region26: #{tpu_custom_call.1} parent=11 // pred_check_branch
          %248 = sbr.rel (%p246) target = $region28
        $region27: #{tpu_custom_call.1} parent=11 // pred_region
          %s250 = ssub.s32 32, 32
          %251 = vsyncadd [#allocation4], %s250
          %s253 = sshll.u32 [#allocation3], 4
          %s254 = int_to_ptr.vmem [resolvable:$true] %s253
          %256 = dma.hbm_to_vmem [thread:$0]  %s5, 32, %s254, [#allocation4]
        $region28: #{tpu_custom_call.1} parent=11 // pred_fallthru
          _
        // Predicated region
        $region29: #{tpu_custom_call.1} parent=11 // pred_check
          %p257 = pneg %p175
        $region30: #{tpu_custom_call.1} parent=11 // pred_check_branch
          %259 = sbr.rel (%p257) target = $region32
        $region31: #{tpu_custom_call.1} parent=11 // pred_region
          _
        $region32: #{tpu_custom_call.1} parent=11 // pred_fallthru
          _
        // Predicated region
        $region33: #{tpu_custom_call.1} parent=11 // pred_check
          %p260 = pneg %p196
        $region34: #{tpu_custom_call.1} parent=11 // pred_check_branch
          %262 = sbr.rel (%p260) target = $region36
        $region35: #{tpu_custom_call.1} parent=11 // pred_region
          _
        $region36: #{tpu_custom_call.1} parent=11 // pred_fallthru
          _
      $region12: #{tpu_custom_call.1} parent=5 // pred_fallthru
        _
      %p263 = scmp.lt.s32.totalorder %s18, 2
      // Predicated region
      $region37: #{tpu_custom_call.1} parent=5 // pred_check
        %p264 = pneg %p263
      $region38: #{tpu_custom_call.1} parent=5 // pred_check_branch
        %266 = sbr.rel (%p264) target = $region40
      $region39: #{tpu_custom_call.1} parent=5 // pred_region
        // Predicated region
        $region41: #{tpu_custom_call.1} parent=39 // pred_check
          %p267 = pneg %p38
        $region42: #{tpu_custom_call.1} parent=39 // pred_check_branch
          %269 = sbr.rel (%p267) target = $region44
        $region43: #{tpu_custom_call.1} parent=39 // pred_region
          %p270 = scmp.lt.s32.totalorder %s18, 1
          %s271 = scalar_select %p270, %s18, 1
          %s272 = smul.addr %s271, 4
          %s273 = smul.addr %s272, 4
          %s274 = scalar_lea.vmem %s0, %s273
        $region44: #{tpu_custom_call.1} parent=39 // pred_fallthru
          _
        // Predicated region
        $region45: #{tpu_custom_call.1} parent=39 // pred_check
          %p275 = pneg %p64
        $region46: #{tpu_custom_call.1} parent=39 // pred_check_branch
          %277 = sbr.rel (%p275) target = $region48
        $region47: #{tpu_custom_call.1} parent=39 // pred_region
          %p278 = scmp.lt.s32.totalorder %s18, 1
          %s279 = scalar_select %p278, %s18, 1
          %s280 = smul.addr %s279, 4
          %s281 = smul.addr %s280, 4
          %s282 = scalar_lea.vmem %s1, %s281
        $region48: #{tpu_custom_call.1} parent=39 // pred_fallthru
          _
      $region40: #{tpu_custom_call.1} parent=5 // pred_fallthru
        _
      %p283 = scmp.le.s32.totalorder 1, %s18
      %p284 = scmp.lt.s32.totalorder %s18, 3
      %p285 = pnand %p283, %p284
      %p286 = pneg %p285
      // Predicated region
      $region49: #{tpu_custom_call.1} parent=5 // pred_check
        _
      $region50: #{tpu_custom_call.1} parent=5 // pred_check_branch
        %288 = sbr.rel (%p285) target = $region52
      $region51: #{tpu_custom_call.1} parent=5 // pred_region
        %s289 = ssub.s32 %s18, 1
        // Predicated region
        $region53: #{tpu_custom_call.1} parent=51 // pred_check
          %p290 = pneg %p154
        $region54: #{tpu_custom_call.1} parent=51 // pred_check_branch
          %292 = sbr.rel (%p290) target = $region56
        $region55: #{tpu_custom_call.1} parent=51 // pred_region
          %293 = dma.done [#allocation4], 32
        $region56: #{tpu_custom_call.1} parent=51 // pred_fallthru
          _
        %p294 = scmp.lt.s32.totalorder %s23, 1
        %s295 = scalar_select %p294, %s23, 1
        %s296 = smul.addr %s295, 4
        %s297 = smul.addr %s296, 4
        %s298 = scalar_lea.vmem %s0, %s297
        %p299 = pneg %p44
        %p300 = pneg %p41
        %p301 = scmp.lt.s32.totalorder %s23, 1
        %s302 = scalar_select %p301, %s23, 1
        %s303 = smul.addr %s302, 4
        %s304 = smul.addr %s303, 4
        %s305 = scalar_lea.vmem %s1, %s304
        %p306 = pneg %p70
        %p307 = pneg %p67
        %p308 = pneg %p91
        %p309 = pneg %p88
        %p310 = pneg %p112
        %p311 = pneg %p109
        %p312 = pneg %p133
        %p313 = pneg %p130
        %p314 = pneg %p154
        %p315 = pneg %p151
        %p316 = pneg %p175
        %p317 = pneg %p172
        %p318 = pneg %p196
        %p319 = pneg %p193
        %p320 = pneg %p222
        %p321 = pneg %p219
        %s322 = sand.u32 %s209, 1
        %s323 = scalar_lea.sflag [#allocation5], %s322
        %s324 = sand.u32 %s209, 1
        %s325 = smul.addr %s324, 48
        %s326 = scalar_lea.vmem [#allocation6], %s325
        %p327 = scmp.lt.s32.totalorder %s23, 1
        %s328 = scalar_select %p327, %s23, 1
        %s329 = smul.addr %s328, 4
        %s330 = smul.addr %s329, 4
        %s331 = scalar_lea.vmem %s0, %s330
        %p332 = scmp.lt.s32.totalorder %s23, 1
        %s333 = scalar_select %p332, %s23, 1
        %s334 = smul.addr %s333, 4
        %s335 = smul.addr %s334, 4
        %s336 = scalar_lea.vmem %s1, %s335
        %v338 = vld [vmem:[%s331] sm:$0xff]
        %v339 = vld [vmem:[%s331 + $0x8] sm:$0xf]
        %v342 = vunpack.c.l.b16 %v338
        %v343 = vunpack.c.h.b16 %v338
        %v344 = vunpack.c.l.b16 %v339
        %v345 = vpack.c.b16 %v342, %v342
        %v346 = vpack.c.b16 %v343, %v343
        %v347 = vpack.c.b16 %v344, %v344
        %348 = vrot.lane.b32.xlu0 %v345, 107
        %v349 = vpop.permute.xlu0 %348
        %350 = vrot.lane.b32.xlu0 %v346, 107
        %v351 = vpop.permute.xlu0 %350
        %352 = vrot.lane.b32.xlu0 %v347, 107
        %v353 = vpop.permute.xlu0 %352
        %vm354 = vcmask 875520
        %v355 = vsel %vm354, %v349, %v351
        %v356 = vsel %vm354, %v351, %v353
        %360 = vst [vmem:[#allocation2] sm:$0xf] %v355
        %361 = vst [vmem:[#allocation2 + $0x8] sm:$0xf] %v356
        %vm362 = vcmask 519168
        %363 = vst.msk [vmem:[#allocation2 + $0x10] sm:$0xf] %vm362, %v353
        %v364 = vld [vmem:[%s331] sm:$0xff]
        %v365 = vld [vmem:[%s331 + $0x8] sm:$0xf]
        %v368 = vunpack.c.l.b16 %v364
        %v369 = vunpack.c.h.b16 %v364
        %v370 = vunpack.c.l.b16 %v365
        %v371 = vpack.c.b16 %v368, %v368
        %v372 = vpack.c.b16 %v369, %v369
        %v373 = vpack.c.b16 %v370, %v370
        %374 = vrot.lane.b32.xlu0 %v371, 106
        %v375 = vpop.permute.xlu0 %374
        %376 = vrot.lane.b32.xlu0 %v372, 106
        %v377 = vpop.permute.xlu0 %376
        %378 = vrot.lane.b32.xlu0 %v373, 106
        %v379 = vpop.permute.xlu0 %378
        %vm380 = vcmask 867328
        %v381 = vsel %vm380, %v375, %v377
        %v382 = vsel %vm380, %v377, %v379
        %386 = vst [vmem:[#allocation2] sm:$0xf0] %v381
        %387 = vst [vmem:[#allocation2 + $0x8] sm:$0xf0] %v382
        %vm388 = vcmask 523268
        %389 = vst.msk [vmem:[#allocation2 + $0x10] sm:$0xf0] %vm388, %v379
        %v390 = vld [vmem:[%s331] sm:$0xff]
        %v391 = vld [vmem:[%s331 + $0x8] sm:$0xf]
        %v394 = vunpack.c.l.b16 %v390
        %v395 = vunpack.c.h.b16 %v390
        %v396 = vunpack.c.l.b16 %v391
        %v397 = vpack.c.b16 %v394, %v394
        %v398 = vpack.c.b16 %v395, %v395
        %v399 = vpack.c.b16 %v396, %v396
        %400 = vrot.lane.b32.xlu0 %v397, 105
        %v401 = vpop.permute.xlu0 %400
        %402 = vrot.lane.b32.xlu0 %v398, 105
        %v403 = vpop.permute.xlu0 %402
        %404 = vrot.lane.b32.xlu0 %v399, 105
        %v405 = vpop.permute.xlu0 %404
        %vm406 = vcmask 859136
        %v407 = vsel %vm406, %v401, %v403
        %v408 = vsel %vm406, %v403, %v405
        %412 = vst [vmem:[#allocation2 + $0x18] sm:$0xf] %v407
        %413 = vst [vmem:[#allocation2 + $0x20] sm:$0xf] %v408
        %414 = vst.msk [vmem:[#allocation2 + $0x28] sm:$0xf] %vm362, %v405
        %v415 = vld [vmem:[%s331] sm:$0xff]
        %v416 = vld [vmem:[%s331 + $0x8] sm:$0xf]
        %v419 = vunpack.c.l.b16 %v415
        %v420 = vunpack.c.h.b16 %v415
        %v421 = vunpack.c.l.b16 %v416
        %v422 = vpack.c.b16 %v419, %v419
        %v423 = vpack.c.b16 %v420, %v420
        %v424 = vpack.c.b16 %v421, %v421
        %425 = vrot.lane.b32.xlu0 %v422, 87
        %v426 = vpop.permute.xlu0 %425
        %427 = vrot.lane.b32.xlu0 %v423, 87
        %v428 = vpop.permute.xlu0 %427
        %429 = vrot.lane.b32.xlu0 %v424, 87
        %v430 = vpop.permute.xlu0 %429
        %vm431 = vcmask 711680
        %v432 = vsel %vm431, %v426, %v428
        %v433 = vsel %vm431, %v428, %v430
        %437 = vst [vmem:[#allocation2 + $0x18] sm:$0xf0] %v432
        %438 = vst [vmem:[#allocation2 + $0x20] sm:$0xf0] %v433
        %439 = vst.msk [vmem:[#allocation2 + $0x28] sm:$0xf0] %vm388, %v430
        %v440 = vld [vmem:[%s331] sm:$0xff]
        %v441 = vld [vmem:[%s331 + $0x8] sm:$0xf]
        %v444 = vunpack.c.l.b16 %v440
        %v445 = vunpack.c.h.b16 %v440
        %v446 = vunpack.c.l.b16 %v441
        %v447 = vpack.c.b16 %v444, %v444
        %v448 = vpack.c.b16 %v445, %v445
        %v449 = vpack.c.b16 %v446, %v446
        %450 = vrot.lane.b32.xlu0 %v447, 86
        %v451 = vpop.permute.xlu0 %450
        %452 = vrot.lane.b32.xlu0 %v448, 86
        %v453 = vpop.permute.xlu0 %452
        %454 = vrot.lane.b32.xlu0 %v449, 86
        %v455 = vpop.permute.xlu0 %454
        %vm456 = vcmask 703488
        %v457 = vsel %vm456, %v451, %v453
        %v458 = vsel %vm456, %v453, %v455
        %462 = vst [vmem:[#allocation2 + $0x30] sm:$0xf] %v457
        %463 = vst [vmem:[#allocation2 + $0x38] sm:$0xf] %v458
        %464 = vst.msk [vmem:[#allocation2 + $0x40] sm:$0xf] %vm362, %v455
        %v465 = vld [vmem:[%s331] sm:$0xff]
        %v466 = vld [vmem:[%s331 + $0x8] sm:$0xf]
        %v469 = vunpack.c.l.b16 %v465
        %v470 = vunpack.c.h.b16 %v465
        %v471 = vunpack.c.l.b16 %v466
        %v472 = vpack.c.b16 %v469, %v469
        %v473 = vpack.c.b16 %v470, %v470
        %v474 = vpack.c.b16 %v471, %v471
        %475 = vrot.lane.b32.xlu0 %v472, 85
        %v476 = vpop.permute.xlu0 %475
        %477 = vrot.lane.b32.xlu0 %v473, 85
        %v478 = vpop.permute.xlu0 %477
        %479 = vrot.lane.b32.xlu0 %v474, 85
        %v480 = vpop.permute.xlu0 %479
        %vm481 = vcmask 695296
        %v482 = vsel %vm481, %v476, %v478
        %v483 = vsel %vm481, %v478, %v480
        %487 = vst [vmem:[#allocation2 + $0x30] sm:$0xf0] %v482
        %488 = vst [vmem:[#allocation2 + $0x38] sm:$0xf0] %v483
        %489 = vst.msk [vmem:[#allocation2 + $0x40] sm:$0xf0] %vm388, %v480
        %v490 = vld [vmem:[%s331] sm:$0xff]
        %v491 = vld [vmem:[%s331 + $0x8] sm:$0xf]
        %v494 = vunpack.c.l.b16 %v490
        %v495 = vunpack.c.h.b16 %v490
        %v496 = vunpack.c.l.b16 %v491
        %v497 = vpack.c.b16 %v494, %v494
        %v498 = vpack.c.b16 %v495, %v495
        %v499 = vpack.c.b16 %v496, %v496
        %500 = vrot.lane.b32.xlu0 %v497, 67
        %v501 = vpop.permute.xlu0 %500
        %502 = vrot.lane.b32.xlu0 %v498, 67
        %v503 = vpop.permute.xlu0 %502
        %504 = vrot.lane.b32.xlu0 %v499, 67
        %v505 = vpop.permute.xlu0 %504
        %vm506 = vcmask 547840
        %v507 = vsel %vm506, %v501, %v503
        %v508 = vsel %vm506, %v503, %v505
        %512 = vst [vmem:[#allocation2 + $0x48] sm:$0xf] %v507
        %513 = vst [vmem:[#allocation2 + $0x50] sm:$0xf] %v508
        %514 = vst.msk [vmem:[#allocation2 + $0x58] sm:$0xf] %vm362, %v505
        %v515 = vld [vmem:[%s331] sm:$0xff]
        %v516 = vld [vmem:[%s331 + $0x8] sm:$0xf]
        %v519 = vunpack.c.l.b16 %v515
        %v520 = vunpack.c.h.b16 %v515
        %v521 = vunpack.c.l.b16 %v516
        %v522 = vpack.c.b16 %v519, %v519
        %v523 = vpack.c.b16 %v520, %v520
        %v524 = vpack.c.b16 %v521, %v521
        %525 = vrot.lane.b32.xlu0 %v522, 66
        %v526 = vpop.permute.xlu0 %525
        %527 = vrot.lane.b32.xlu0 %v523, 66
        %v528 = vpop.permute.xlu0 %527
        %529 = vrot.lane.b32.xlu0 %v524, 66
        %v530 = vpop.permute.xlu0 %529
        %vm531 = vcmask 539648
        %v532 = vsel %vm531, %v526, %v528
        %v533 = vsel %vm531, %v528, %v530
        %537 = vst [vmem:[#allocation2 + $0x48] sm:$0xf0] %v532
        %538 = vst [vmem:[#allocation2 + $0x50] sm:$0xf0] %v533
        %539 = vst.msk [vmem:[#allocation2 + $0x58] sm:$0xf0] %vm388, %v530
        %v540 = vld [vmem:[%s331] sm:$0xff]
        %v541 = vld [vmem:[%s331 + $0x8] sm:$0xf]
        %v544 = vunpack.c.l.b16 %v540
        %v545 = vunpack.c.h.b16 %v540
        %v546 = vunpack.c.l.b16 %v541
        %v547 = vpack.c.b16 %v544, %v544
        %v548 = vpack.c.b16 %v545, %v545
        %v549 = vpack.c.b16 %v546, %v546
        %550 = vrot.lane.b32.xlu0 %v547, 65
        %v551 = vpop.permute.xlu0 %550
        %552 = vrot.lane.b32.xlu0 %v548, 65
        %v553 = vpop.permute.xlu0 %552
        %554 = vrot.lane.b32.xlu0 %v549, 65
        %v555 = vpop.permute.xlu0 %554
        %vm556 = vcmask 531456
        %v557 = vsel %vm556, %v551, %v553
        %v558 = vsel %vm556, %v553, %v555
        %562 = vst [vmem:[#allocation2 + $0x60] sm:$0xf] %v557
        %563 = vst [vmem:[#allocation2 + $0x68] sm:$0xf] %v558
        %564 = vst.msk [vmem:[#allocation2 + $0x70] sm:$0xf] %vm362, %v555
        %v565 = vld [vmem:[%s336] sm:$0xff]
        %v566 = vld [vmem:[%s336 + $0x8] sm:$0xf]
        %v569 = vunpack.c.l.b16 %v565
        %v570 = vunpack.c.h.b16 %v565
        %v571 = vunpack.c.l.b16 %v566
        %v572 = vpack.c.b16 %v569, %v569
        %v573 = vpack.c.b16 %v570, %v570
        %v574 = vpack.c.b16 %v571, %v571
        %578 = vst [vmem:[#allocation2 + $0x60] sm:$0xf0] %v572
        %579 = vst [vmem:[#allocation2 + $0x68] sm:$0xf0] %v573
        %580 = vst.msk [vmem:[#allocation2 + $0x70] sm:$0xf0] %vm388, %v574
        %v581 = vld [vmem:[%s336] sm:$0xff]
        %v582 = vld [vmem:[%s336 + $0x8] sm:$0xf]
        %v585 = vunpack.c.l.b16 %v581
        %v586 = vunpack.c.h.b16 %v581
        %v587 = vunpack.c.l.b16 %v582
        %v588 = vpack.c.b16 %v585, %v585
        %v589 = vpack.c.b16 %v586, %v586
        %v590 = vpack.c.b16 %v587, %v587
        %591 = vrot.lane.b32.xlu0 %v588, 126
        %v592 = vpop.permute.xlu0 %591
        %593 = vrot.lane.b32.xlu0 %v589, 126
        %v594 = vpop.permute.xlu0 %593
        %595 = vrot.lane.b32.xlu0 %v590, 126
        %v596 = vpop.permute.xlu0 %595
        %vm597 = vcmask 1031168
        %v598 = vsel %vm597, %v592, %v594
        %v599 = vsel %vm597, %v594, %v596
        %603 = vst [vmem:[#allocation2 + $0x78] sm:$0xf] %v598
        %604 = vst [vmem:[#allocation2 + $0x80] sm:$0xf] %v599
        %605 = vst.msk [vmem:[#allocation2 + $0x88] sm:$0xf] %vm362, %v596
        %v606 = vld [vmem:[%s336] sm:$0xff]
        %v607 = vld [vmem:[%s336 + $0x8] sm:$0xf]
        %v610 = vunpack.c.l.b16 %v606
        %v611 = vunpack.c.h.b16 %v606
        %v612 = vunpack.c.l.b16 %v607
        %v613 = vpack.c.b16 %v610, %v610
        %v614 = vpack.c.b16 %v611, %v611
        %v615 = vpack.c.b16 %v612, %v612
        %616 = vrot.lane.b32.xlu0 %v613, 124
        %v617 = vpop.permute.xlu0 %616
        %618 = vrot.lane.b32.xlu0 %v614, 124
        %v619 = vpop.permute.xlu0 %618
        %620 = vrot.lane.b32.xlu0 %v615, 124
        %v621 = vpop.permute.xlu0 %620
        %vm622 = vcmask 1014784
        %v623 = vsel %vm622, %v617, %v619
        %v624 = vsel %vm622, %v619, %v621
        %628 = vst [vmem:[#allocation2 + $0x78] sm:$0xf0] %v623
        %629 = vst [vmem:[#allocation2 + $0x80] sm:$0xf0] %v624
        %630 = vst.msk [vmem:[#allocation2 + $0x88] sm:$0xf0] %vm388, %v621
        %v631 = vld [vmem:[%s336] sm:$0xff]
        %v632 = vld [vmem:[%s336 + $0x8] sm:$0xf]
        %v635 = vunpack.c.l.b16 %v631
        %v636 = vunpack.c.h.b16 %v631
        %v637 = vunpack.c.l.b16 %v632
        %v638 = vpack.c.b16 %v635, %v635
        %v639 = vpack.c.b16 %v636, %v636
        %v640 = vpack.c.b16 %v637, %v637
        %641 = vrot.lane.b32.xlu0 %v638, 88
        %v642 = vpop.permute.xlu0 %641
        %643 = vrot.lane.b32.xlu0 %v639, 88
        %v644 = vpop.permute.xlu0 %643
        %645 = vrot.lane.b32.xlu0 %v640, 88
        %v646 = vpop.permute.xlu0 %645
        %vm647 = vcmask 719872
        %v648 = vsel %vm647, %v642, %v644
        %v649 = vsel %vm647, %v644, %v646
        %653 = vst [vmem:[#allocation2 + $0x90] sm:$0xf] %v648
        %654 = vst [vmem:[#allocation2 + $0x98] sm:$0xf] %v649
        %655 = vst.msk [vmem:[#allocation2 + $0xa0] sm:$0xf] %vm362, %v646
        %v656 = vld [vmem:[%s336] sm:$0xff]
        %v657 = vld [vmem:[%s336 + $0x8] sm:$0xf]
        %v660 = vunpack.c.l.b16 %v656
        %v661 = vunpack.c.h.b16 %v656
        %v662 = vunpack.c.l.b16 %v657
        %v663 = vpack.c.b16 %v660, %v660
        %v664 = vpack.c.b16 %v661, %v661
        %v665 = vpack.c.b16 %v662, %v662
        %666 = vrot.lane.b32.xlu0 %v663, 86
        %v667 = vpop.permute.xlu0 %666
        %668 = vrot.lane.b32.xlu0 %v664, 86
        %v669 = vpop.permute.xlu0 %668
        %670 = vrot.lane.b32.xlu0 %v665, 86
        %v671 = vpop.permute.xlu0 %670
        %v672 = vsel %vm456, %v667, %v669
        %v673 = vsel %vm456, %v669, %v671
        %677 = vst [vmem:[#allocation2 + $0x90] sm:$0xf0] %v672
        %678 = vst [vmem:[#allocation2 + $0x98] sm:$0xf0] %v673
        %679 = vst.msk [vmem:[#allocation2 + $0xa0] sm:$0xf0] %vm388, %v671
        %v680 = vld [vmem:[%s336] sm:$0xff]
        %v681 = vld [vmem:[%s336 + $0x8] sm:$0xf]
        %v684 = vunpack.c.l.b16 %v680
        %v685 = vunpack.c.h.b16 %v680
        %v686 = vunpack.c.l.b16 %v681
        %v687 = vpack.c.b16 %v684, %v684
        %v688 = vpack.c.b16 %v685, %v685
        %v689 = vpack.c.b16 %v686, %v686
        %690 = vrot.lane.b32.xlu0 %v687, 84
        %v691 = vpop.permute.xlu0 %690
        %692 = vrot.lane.b32.xlu0 %v688, 84
        %v693 = vpop.permute.xlu0 %692
        %694 = vrot.lane.b32.xlu0 %v689, 84
        %v695 = vpop.permute.xlu0 %694
        %vm696 = vcmask 687104
        %v697 = vsel %vm696, %v691, %v693
        %v698 = vsel %vm696, %v693, %v695
        %702 = vst [vmem:[#allocation2 + $0xa8] sm:$0xf] %v697
        %703 = vst [vmem:[#allocation2 + $0xb0] sm:$0xf] %v698
        %704 = vst.msk [vmem:[#allocation2 + $0xb8] sm:$0xf] %vm362, %v695
        %v705 = vld [vmem:[%s336] sm:$0xff]
        %v706 = vld [vmem:[%s336 + $0x8] sm:$0xff]
        %v709 = vunpack.c.l.b16 %v705
        %v710 = vunpack.c.h.b16 %v705
        %v711 = vunpack.c.l.b16 %v706
        %v712 = vunpack.c.h.b16 %v706
        %v713 = vpack.c.b16 %v709, %v709
        %v714 = vpack.c.b16 %v710, %v710
        %v715 = vpack.c.b16 %v711, %v711
        %v716 = vpack.c.b16 %v712, %v712
        %717 = vrot.lane.b32.xlu0 %v713, 48
        %v718 = vpop.permute.xlu0 %717
        %719 = vrot.lane.b32.xlu0 %v714, 48
        %v720 = vpop.permute.xlu0 %719
        %721 = vrot.lane.b32.xlu0 %v715, 48
        %v722 = vpop.permute.xlu0 %721
        %723 = vrot.lane.b32.xlu0 %v716, 48
        %v724 = vpop.permute.xlu0 %723
        %vm725 = vcmask 392192
        %v726 = vsel %vm725, %v718, %v720
        %v727 = vsel %vm725, %v720, %v722
        %v728 = vsel %vm725, %v722, %v724
        %732 = vst [vmem:[#allocation2 + $0xa8] sm:$0xf0] %v726
        %733 = vst [vmem:[#allocation2 + $0xb0] sm:$0xf0] %v727
        %734 = vst.msk [vmem:[#allocation2 + $0xb8] sm:$0xf0] %vm388, %v728
        %v735 = vld [vmem:[%s336] sm:$0xff]
        %v736 = vld [vmem:[%s336 + $0x8] sm:$0xff]
        %v739 = vunpack.c.l.b16 %v735
        %v740 = vunpack.c.h.b16 %v735
        %v741 = vunpack.c.l.b16 %v736
        %v742 = vunpack.c.h.b16 %v736
        %v743 = vpack.c.b16 %v739, %v739
        %v744 = vpack.c.b16 %v740, %v740
        %v745 = vpack.c.b16 %v741, %v741
        %v746 = vpack.c.b16 %v742, %v742
        %747 = vrot.lane.b32.xlu0 %v743, 46
        %v748 = vpop.permute.xlu0 %747
        %749 = vrot.lane.b32.xlu0 %v744, 46
        %v750 = vpop.permute.xlu0 %749
        %751 = vrot.lane.b32.xlu0 %v745, 46
        %v752 = vpop.permute.xlu0 %751
        %753 = vrot.lane.b32.xlu0 %v746, 46
        %v754 = vpop.permute.xlu0 %753
        %vm755 = vcmask 375808
        %v756 = vsel %vm755, %v748, %v750
        %v757 = vsel %vm755, %v750, %v752
        %v758 = vsel %vm755, %v752, %v754
        %762 = vst [vmem:[#allocation2 + $0xc0] sm:$0xf] %v756
        %763 = vst [vmem:[#allocation2 + $0xc8] sm:$0xf] %v757
        %764 = vst.msk [vmem:[#allocation2 + $0xd0] sm:$0xf] %vm362, %v758
        %v765 = vld [vmem:[%s336] sm:$0xff]
        %v766 = vld [vmem:[%s336 + $0x8] sm:$0xff]
        %v769 = vunpack.c.l.b16 %v765
        %v770 = vunpack.c.h.b16 %v765
        %v771 = vunpack.c.l.b16 %v766
        %v772 = vunpack.c.h.b16 %v766
        %v773 = vpack.c.b16 %v769, %v769
        %v774 = vpack.c.b16 %v770, %v770
        %v775 = vpack.c.b16 %v771, %v771
        %v776 = vpack.c.b16 %v772, %v772
        %777 = vrot.lane.b32.xlu0 %v773, 44
        %v778 = vpop.permute.xlu0 %777
        %779 = vrot.lane.b32.xlu0 %v774, 44
        %v780 = vpop.permute.xlu0 %779
        %781 = vrot.lane.b32.xlu0 %v775, 44
        %v782 = vpop.permute.xlu0 %781
        %783 = vrot.lane.b32.xlu0 %v776, 44
        %v784 = vpop.permute.xlu0 %783
        %vm785 = vcmask 359424
        %v786 = vsel %vm785, %v778, %v780
        %v787 = vsel %vm785, %v780, %v782
        %v788 = vsel %vm785, %v782, %v784
        %792 = vst [vmem:[#allocation2 + $0xc0] sm:$0xf0] %v786
        %793 = vst [vmem:[#allocation2 + $0xc8] sm:$0xf0] %v787
        %794 = vst.msk [vmem:[#allocation2 + $0xd0] sm:$0xf0] %vm388, %v788
        %v795 = vld [vmem:[%s2] sm:$0xff]
        %v796 = vld [vmem:[%s2 + $0x8] sm:$0xff]
        %v797 = vld [vmem:[%s2 + $0x10] sm:$0xff]
        %v798 = vld [vmem:[%s2 + $0x18] sm:$0xff]
        %v799 = vld [vmem:[#allocation2] sm:$0xff]
        %v800 = vld [vmem:[#allocation2 + $0x8] sm:$0xff]
        %v801 = vld [vmem:[#allocation2 + $0x10] sm:$0xff]
        %v802 = vld [vmem:[#allocation2 + $0x18] sm:$0xff]
        %v803 = vld [vmem:[#allocation2 + $0x20] sm:$0xff]
        %v804 = vld [vmem:[#allocation2 + $0x28] sm:$0xff]
        %v805 = vld [vmem:[#allocation2 + $0x30] sm:$0xff]
        %v806 = vld [vmem:[#allocation2 + $0x38] sm:$0xff]
        %v807 = vld [vmem:[#allocation2 + $0x40] sm:$0xff]
        %v808 = vld [vmem:[#allocation2 + $0x48] sm:$0xff]
        %v809 = vld [vmem:[#allocation2 + $0x50] sm:$0xff]
        %v810 = vld [vmem:[#allocation2 + $0x58] sm:$0xff]
        %v811 = vld [vmem:[#allocation2 + $0x60] sm:$0xff]
        %v812 = vld [vmem:[#allocation2 + $0x68] sm:$0xff]
        %v813 = vld [vmem:[#allocation2 + $0x70] sm:$0xff]
        %v814 = vld [vmem:[#allocation2 + $0x78] sm:$0xff]
        %v815 = vld [vmem:[#allocation2 + $0x80] sm:$0xff]
        %v816 = vld [vmem:[#allocation2 + $0x88] sm:$0xff]
        %v817 = vld [vmem:[#allocation2 + $0x90] sm:$0xff]
        %v818 = vld [vmem:[#allocation2 + $0x98] sm:$0xff]
        %v819 = vld [vmem:[#allocation2 + $0xa0] sm:$0xff]
        %v820 = vld [vmem:[#allocation2 + $0xa8] sm:$0xff]
        %v821 = vld [vmem:[#allocation2 + $0xb0] sm:$0xff]
        %v822 = vld [vmem:[#allocation2 + $0xb8] sm:$0xff]
        %v823 = vld [vmem:[#allocation2 + $0xc0] sm:$0xff]
        %v824 = vld [vmem:[#allocation2 + $0xc8] sm:$0xff]
        %v825 = vld [vmem:[#allocation2 + $0xd0] sm:$0xff]
        %v830 = vunpack.c.l.b16 %v795
        %v831 = vunpack.c.h.b16 %v795
        %v832 = vunpack.c.l.b16 %v796
        %v833 = vunpack.c.h.b16 %v796
        %v834 = vunpack.c.l.b16 %v797
        %v835 = vunpack.c.h.b16 %v797
        %v836 = vunpack.c.l.b16 %v798
        %v837 = vunpack.c.h.b16 %v798
        %v838 = vpack.c.b16 %v832, %v830
        %v839 = vpack.c.b16 %v833, %v831
        %v840 = vpack.c.b16 %v836, %v834
        %v841 = vpack.c.b16 %v837, %v835
        %vm844 = vcmask 130048
        %v846 = vsel %vm844, %v839, 0
        %v849 = vsel %vm844, %v841, 0
        %851 = vmatprep.subr.bf16.mxu0 %v800
        %852 = vmatpush1.bf16.msra.mxu0 %v799
        %853 = vmatprep.subr.bf16.mxu0 %v803
        %854 = vmatpush1.bf16.msra.mxu0 %v802
        %855 = vmatprep.subr.bf16.mxu0 %v806
        %856 = vmatpush1.bf16.msra.mxu0 %v805
        %857 = vmatprep.subr.bf16.mxu0 %v809
        %858 = vmatpush1.bf16.msra.mxu0 %v808
        %859 = vmatprep.subr.bf16.mxu0 %v812
        %860 = vmatpush1.bf16.msra.mxu0 %v811
        %861 = vmatprep.subr.bf16.mxu0 %v815
        %862 = vmatpush1.bf16.msra.mxu0 %v814
        %863 = vmatprep.subr.bf16.mxu0 %v818
        %864 = vmatpush1.bf16.msra.mxu0 %v817
        %865 = vmatprep.subr.bf16.mxu0 %v821
        %866 = vmatpush1.bf16.msra.mxu0 %v820
        %867 = vmatprep.subr.bf16.mxu0 %v824
        %868 = vmatpush1.bf16.msra.mxu0 %v823
        %869 = vmatprep.subr.bf16.mxu0 0
        %870 = vmatpush1.bf16.msra.mxu0 0
        %871 = vmatprep.subr.bf16.mxu0 0
        %872 = vmatpush1.bf16.msra.mxu0 0
        %873 = vmatprep.subr.bf16.mxu0 0
        %874 = vmatpush1.bf16.msra.mxu0 0
        %875 = vmatprep.subr.bf16.mxu0 0
        %876 = vmatpush1.bf16.msra.mxu0 0
        %877 = vmatprep.subr.bf16.mxu0 0
        %878 = vmatpush1.bf16.msra.mxu0 0
        %879 = vmatprep.subr.bf16.mxu0 0
        %880 = vmatpush1.bf16.msra.mxu0 0
        %881 = vmatprep.subr.bf16.mxu0 0
        %882 = vmatpush1.bf16.msra.mxu0 0
        %883 = vmatprep.mubr.bf16.mxu0 %v846
        %884 = vmatmul.mubr.bf16.gmra.mrb[0].mxu0 %v838
        %v885 = vpop.f32.mrb[0].mxu0
        %v886 = vadd.f32 0.0, %v885
        %v887 = vpop.f32.mrb[0].mxu0
        %v888 = vadd.f32 0.0, %v887
        %v889 = vpop.f32.mrb[0].mxu0
        %v890 = vadd.f32 0.0, %v889
        %v891 = vpop.f32.mrb[0].mxu0
        %v892 = vadd.f32 0.0, %v891
        %893 = vmatprep.mubr.bf16.mxu0 %v849
        %894 = vmatmul.mubr.bf16.gmra.mrb[0].mxu0 %v840
        %v895 = vpop.f32.mrb[0].mxu0
        %v896 = vadd.f32 0.0, %v895
        %v897 = vpop.f32.mrb[0].mxu0
        %v898 = vadd.f32 0.0, %v897
        %v899 = vpop.f32.mrb[0].mxu0
        %v900 = vadd.f32 0.0, %v899
        %v901 = vpop.f32.mrb[0].mxu0
        %v902 = vadd.f32 0.0, %v901
        %903 = vdwg.mxu0
        %904 = vmatprep.subr.bf16.mxu0 0
        %905 = vmatpush1.bf16.msra.mxu0 %v801
        %906 = vmatprep.subr.bf16.mxu0 0
        %907 = vmatpush1.bf16.msra.mxu0 %v804
        %908 = vmatprep.subr.bf16.mxu0 0
        %909 = vmatpush1.bf16.msra.mxu0 %v807
        %910 = vmatprep.subr.bf16.mxu0 0
        %911 = vmatpush1.bf16.msra.mxu0 %v810
        %912 = vmatprep.subr.bf16.mxu0 0
        %913 = vmatpush1.bf16.msra.mxu0 %v813
        %914 = vmatprep.subr.bf16.mxu0 0
        %915 = vmatpush1.bf16.msra.mxu0 %v816
        %916 = vmatprep.subr.bf16.mxu0 0
        %917 = vmatpush1.bf16.msra.mxu0 %v819
        %918 = vmatprep.subr.bf16.mxu0 0
        %919 = vmatpush1.bf16.msra.mxu0 %v822
        %920 = vmatprep.subr.bf16.mxu0 0
        %921 = vmatpush1.bf16.msra.mxu0 %v825
        %922 = vmatprep.subr.bf16.mxu0 0
        %923 = vmatpush1.bf16.msra.mxu0 0
        %924 = vmatprep.subr.bf16.mxu0 0
        %925 = vmatpush1.bf16.msra.mxu0 0
        %926 = vmatprep.subr.bf16.mxu0 0
        %927 = vmatpush1.bf16.msra.mxu0 0
        %928 = vmatprep.subr.bf16.mxu0 0
        %929 = vmatpush1.bf16.msra.mxu0 0
        %930 = vmatprep.subr.bf16.mxu0 0
        %931 = vmatpush1.bf16.msra.mxu0 0
        %932 = vmatprep.subr.bf16.mxu0 0
        %933 = vmatpush1.bf16.msra.mxu0 0
        %934 = vmatprep.subr.bf16.mxu0 0
        %935 = vmatpush1.bf16.msra.mxu0 0
        %936 = vmatprep.mubr.bf16.mxu0 %v846
        %937 = vmatmul.mubr.bf16.gmra.mrb[0].mxu0 %v838
        %v938 = vpop.f32.mrb[0].mxu0
        %v939 = vadd.f32 0.0, %v938
        %v940 = vpop.f32.mrb[0].mxu0
        %v941 = vpop.f32.mrb[0].mxu0
        %v942 = vadd.f32 0.0, %v941
        %v943 = vpop.f32.mrb[0].mxu0
        %944 = vmatprep.mubr.bf16.mxu0 %v849
        %945 = vmatmul.mubr.bf16.gmra.mrb[0].mxu0 %v840
        %v946 = vpop.f32.mrb[0].mxu0
        %v947 = vadd.f32 0.0, %v946
        %v948 = vpop.f32.mrb[0].mxu0
        %v949 = vpop.f32.mrb[0].mxu0
        %v950 = vadd.f32 0.0, %v949
        %v951 = vpop.f32.mrb[0].mxu0
        %952 = vdwg.mxu0
        %v953 = vld [vmem:[%s3] sm:$0xff]
        %v954 = vld [vmem:[%s3 + $0x8] sm:$0xff]
        %v955 = vld [vmem:[%s3 + $0x10] sm:$0xff]
        %v956 = vld [vmem:[%s3 + $0x18] sm:$0xff]
        %958 = vset.pattern.permute.xlu0 0
        %959 = vperm.xlu0 %958, %v953
        %v960 = vpop.permute.xlu0 %959
        %963 = vset.pattern.permute.xlu0 0
        %964 = vperm.xlu0 %963, %v954
        %v965 = vpop.permute.xlu0 %964
        %968 = vset.pattern.permute.xlu0 0
        %969 = vperm.xlu0 %968, %v955
        %v970 = vpop.permute.xlu0 %969
        %973 = vset.pattern.permute.xlu0 0
        %974 = vperm.xlu0 %973, %v956
        %v975 = vpop.permute.xlu0 %974
        %v977 = vmul.f32 %v886, %v960
        %v978 = vmul.f32 %v888, %v960
        %v979 = vmul.f32 %v939, %v960
        %v980 = vmul.f32 %v890, %v965
        %v981 = vmul.f32 %v892, %v965
        %v982 = vmul.f32 %v942, %v965
        %v983 = vmul.f32 %v896, %v970
        %v984 = vmul.f32 %v898, %v970
        %v985 = vmul.f32 %v947, %v970
        %v986 = vmul.f32 %v900, %v975
        %v987 = vmul.f32 %v902, %v975
        %v988 = vmul.f32 %v950, %v975
        %989 = vset.pattern.permute.xlu0 1
        %990 = vperm.xlu0 %989, %v953
        %v991 = vpop.permute.xlu0 %990
        %993 = vset.pattern.permute.xlu0 1
        %994 = vperm.xlu0 %993, %v954
        %v995 = vpop.permute.xlu0 %994
        %997 = vset.pattern.permute.xlu0 1
        %998 = vperm.xlu0 %997, %v955
        %v999 = vpop.permute.xlu0 %998
        %1001 = vset.pattern.permute.xlu0 1
        %1002 = vperm.xlu0 %1001, %v956
        %v1003 = vpop.permute.xlu0 %1002
        %v1005 = vadd.f32 %v977, %v991
        %v1006 = vadd.f32 %v978, %v991
        %v1007 = vadd.f32 %v979, %v991
        %v1008 = vadd.f32 %v980, %v995
        %v1009 = vadd.f32 %v981, %v995
        %v1010 = vadd.f32 %v982, %v995
        %v1011 = vadd.f32 %v983, %v999
        %v1012 = vadd.f32 %v984, %v999
        %v1013 = vadd.f32 %v985, %v999
        %v1014 = vadd.f32 %v986, %v1003
        %v1015 = vadd.f32 %v987, %v1003
        %v1016 = vadd.f32 %v988, %v1003
        %v1017 = vmax.f32 %v1005, 0.0
        %v1018 = vmax.f32 %v1006, 0.0
        %v1019 = vmax.f32 %v1007, 0.0
        %v1020 = vmax.f32 %v1008, 0.0
        %v1021 = vmax.f32 %v1009, 0.0
        %v1022 = vmax.f32 %v1010, 0.0
        %v1023 = vmax.f32 %v1011, 0.0
        %v1024 = vmax.f32 %v1012, 0.0
        %v1025 = vmax.f32 %v1013, 0.0
        %v1026 = vmax.f32 %v1014, 0.0
        %v1027 = vmax.f32 %v1015, 0.0
        %v1028 = vmax.f32 %v1016, 0.0
        %v1029 = vld [vmem:[%s7] sm:$0x7]
        %v1031 = vlaneseq
        %v1032 = vshrl.u32 %v1031, 7
        %v1033 = vsub.s32 0, %v1032
        %v1034 = vrot.slane %v1029, %v1033
        %v1035 = vlaneseq
        %v1036 = vshrl.u32 %v1035, 7
        %v1037 = vsub.s32 1, %v1036
        %v1038 = vrot.slane %v1029, %v1037
        %v1039 = vlaneseq
        %v1040 = vshrl.u32 %v1039, 7
        %v1041 = vsub.s32 2, %v1040
        %v1042 = vrot.slane %v1029, %v1041
        %v1046 = vmul.f32 %v1017, %v1034
        %v1047 = vmul.f32 %v1018, %v1038
        %v1048 = vmul.f32 %v1019, %v1042
        %v1049 = vmul.f32 %v1020, %v1034
        %v1050 = vmul.f32 %v1021, %v1038
        %v1051 = vmul.f32 %v1022, %v1042
        %v1052 = vmul.f32 %v1023, %v1034
        %v1053 = vmul.f32 %v1024, %v1038
        %v1054 = vmul.f32 %v1025, %v1042
        %v1055 = vmul.f32 %v1026, %v1034
        %v1056 = vmul.f32 %v1027, %v1038
        %v1057 = vmul.f32 %v1028, %v1042
        %v1058 = vadd.f32 %v1046, %v1047
        %vm1059 = vcmask 523264
        %v1060 = vsel %vm1059, %v1048, 0.0
        %v1061 = vadd.f32 %v1058, %v1060
        %1062 = vadd.xlane.f32.xlu0 %v1061
        %v1063 = vpop.xlane.xlu0 %1062
        %v1064 = vadd.f32 %v1049, %v1050
        %v1065 = vsel %vm1059, %v1051, 0.0
        %v1066 = vadd.f32 %v1064, %v1065
        %1067 = vadd.xlane.f32.xlu0 %v1066
        %v1068 = vpop.xlane.xlu0 %1067
        %v1069 = vadd.f32 %v1052, %v1053
        %v1070 = vsel %vm1059, %v1054, 0.0
        %v1071 = vadd.f32 %v1069, %v1070
        %1072 = vadd.xlane.f32.xlu0 %v1071
        %v1073 = vpop.xlane.xlu0 %1072
        %v1074 = vadd.f32 %v1055, %v1056
        %v1075 = vsel %vm1059, %v1057, 0.0
        %v1076 = vadd.f32 %v1074, %v1075
        %1077 = vadd.xlane.f32.xlu0 %v1076
        %v1078 = vpop.xlane.xlu0 %1077
        %v1079 = vmul.f32 %v1063, 0.00390625
        %v1080 = vmul.f32 %v1068, 0.00390625
        %v1081 = vmul.f32 %v1073, 0.00390625
        %v1082 = vmul.f32 %v1078, 0.00390625
        %v1083 = vadd.f32 %v1079, %v1081
        %v1084 = vadd.f32 %v1080, %v1082
        %v1085 = vld [vmem:[%s4] sm:$0xff]
        %v1086 = vld [vmem:[%s4 + $0x8] sm:$0xff]
        %v1087 = vmul.f32 %v1085, %v1083
        %v1088 = vmul.f32 %v1086, %v1084
        %vm1089 = vcmask 64512
        %v1090 = vsel %vm1089, %v1087, 0.0
        %v1091 = vsel %vm1089, %v1088, 0.0
        %v1092 = vadd.f32 %v1090, %v1091
        %v1093 = vrot.slane %v1092, 4
        %v1094 = vadd.f32 %v1092, %v1093
        %v1095 = vrot.slane %v1094, 2
        %v1096 = vadd.f32 %v1094, %v1095
        %v1097 = vrot.slane %v1096, 1
        %v1098 = vadd.f32 %v1096, %v1097
        %v1099 = vld [vmem:[#allocation3] sm:$0x1]
        %v1100 = vmul.f32 %v1098, %v1099
        %v1101 = vld [vmem:[#allocation3 + $0x1] sm:$0x1]
        %v1102 = vadd.f32 %v1100, %v1101
        %v1103 = vmax.f32 %v1102, 0.0
        %v1104 = vld [vmem:[%s6] sm:$0xff]
        %v1105 = vld [vmem:[%s6 + $0x8] sm:$0xff]
        %v1106 = vld [vmem:[%s6 + $0x10] sm:$0xff]
        %v1107 = vld [vmem:[%s6 + $0x18] sm:$0xff]
        %v1108 = vlaneseq
        %v1109 = vshrl.u32 %v1108, 7
        %v1110 = vsub.s32 0, %v1109
        %v1111 = vrot.slane %v1103, %v1110
        %v1112 = vmul.f32 %v1104, %v1111
        %v1113 = vmul.f32 %v1105, %v1111
        %v1114 = vmul.f32 %v1106, %v1111
        %v1115 = vmul.f32 %v1107, %v1111
        %v1116 = vsel %vm1089, %v1112, 0.0
        %1117 = vadd.xlane.f32.xlu0 %v1116
        %v1118 = vpop.xlane.xlu0 %1117
        %v1119 = vsel %vm1089, %v1113, 0.0
        %1120 = vadd.xlane.f32.xlu0 %v1119
        %v1121 = vpop.xlane.xlu0 %1120
        %v1122 = vsel %vm1089, %v1114, 0.0
        %1123 = vadd.xlane.f32.xlu0 %v1122
        %v1124 = vpop.xlane.xlu0 %1123
        %v1125 = vsel %vm1089, %v1115, 0.0
        %1126 = vadd.xlane.f32.xlu0 %v1125
        %v1127 = vpop.xlane.xlu0 %1126
        %v1128 = vmax.f32 %v1118, %v1124
        %v1129 = vmax.f32 %v1121, %v1127
        %v1130 = vsub.f32 %v1118, %v1128
        %v1131 = vsub.f32 %v1121, %v1129
        %v1132 = vmul.f32 %v1130, 1.442695
        %v1133 = vpow.pop %v1132
        %v1134 = vmul.f32 %v1131, 1.442695
        %v1135 = vpow.pop %v1134
        %v1136 = vsub.f32 %v1124, %v1128
        %v1137 = vsub.f32 %v1127, %v1129
        %v1138 = vmul.f32 %v1136, 1.442695
        %v1139 = vpow.pop %v1138
        %v1140 = vmul.f32 %v1137, 1.442695
        %v1141 = vpow.pop %v1140
        %v1142 = vadd.f32 %v1133, %v1139
        %v1143 = vadd.f32 %v1135, %v1141
        %v1144 = vrcp.pop %v1142
        %v1145 = vrcp.pop %v1143
        %v1146 = vmul.f32 %v1133, %v1144
        %v1147 = vmul.f32 %v1135, %v1145
        %v1148 = vsub.f32 1.0, %v1146
        %v1149 = vsub.f32 1.0, %v1147
        %v1150 = vmul.f32 %v1146, %v1017
        %v1151 = vmul.f32 %v1146, %v1018
        %v1152 = vmul.f32 %v1146, %v1019
        %v1153 = vmul.f32 %v1147, %v1020
        %v1154 = vmul.f32 %v1147, %v1021
        %v1155 = vmul.f32 %v1147, %v1022
        %v1156 = vmul.f32 %v1148, %v1023
        %v1157 = vmul.f32 %v1148, %v1024
        %v1158 = vmul.f32 %v1148, %v1025
        %v1159 = vmul.f32 %v1149, %v1026
        %v1160 = vmul.f32 %v1149, %v1027
        %v1161 = vmul.f32 %v1149, %v1028
        %v1162 = vadd.f32 %v1150, %v1156
        %v1163 = vadd.f32 %v1151, %v1157
        %v1164 = vadd.f32 %v1152, %v1158
        %v1165 = vadd.f32 %v1153, %v1159
        %v1166 = vadd.f32 %v1154, %v1160
        %v1167 = vadd.f32 %v1155, %v1161
        %1168 = vst [vmem:[%s326] sm:$0xff] %v1162
        %1169 = vst [vmem:[%s326 + $0x8] sm:$0xff] %v1163
        %1170 = vst.msk [vmem:[%s326 + $0x10] sm:$0xff] %vm1059, %v1164
        %1171 = vst [vmem:[%s326 + $0x18] sm:$0xff] %v1165
        %1172 = vst [vmem:[%s326 + $0x20] sm:$0xff] %v1166
        %1173 = vst.msk [vmem:[%s326 + $0x28] sm:$0xff] %vm1059, %v1167
        %s1174 = sand.u32 %s209, 1
        %s1175 = scalar_lea.sflag [#allocation5], %s1174
        %s1176 = sand.u32 %s209, 1
        %s1177 = smul.addr %s1176, 48
        %s1178 = scalar_lea.vmem [#allocation6], %s1177
        // Predicated region
        $region57: #{tpu_custom_call.1} parent=51 // pred_check
          %p1179 = pneg %p219
        $region58: #{tpu_custom_call.1} parent=51 // pred_check_branch
          %1181 = sbr.rel (%p1179) target = $region60
        $region59: #{tpu_custom_call.1} parent=51 // pred_region
          %s1183 = ssub.s32 768, 768
          %1184 = vsyncadd %s1175, %s1183
          %s1185 = smul.addr %s23, 6
          %s1186 = smul.addr %s1185, 128
          %s1187 = scalar_lea.hbm %s8, %s1186
          %s1188 = sshll.u32 %s1178, 4
          %s1189 = int_to_ptr.vmem [resolvable:$true] %s1188
          %1194 = dma.vmem_to_hbm [thread:$0]  %s1189, 768, %s1187, %s1175, 384, 384, 24
        $region60: #{tpu_custom_call.1} parent=51 // pred_fallthru
          _
      $region52: #{tpu_custom_call.1} parent=5 // pred_fallthru
        _
      %p1195 = scmp.le.s32.totalorder 2, %s18
      // Predicated region
      $region61: #{tpu_custom_call.1} parent=5 // pred_check
        %p1196 = pneg %p1195
      $region62: #{tpu_custom_call.1} parent=5 // pred_check_branch
        %1198 = sbr.rel (%p1196) target = $region64
      $region63: #{tpu_custom_call.1} parent=5 // pred_region
        %s1199 = ssub.s32 %s18, 2
        // Predicated region
        $region65: #{tpu_custom_call.1} parent=63 // pred_check
          %p1200 = pneg %p225
        $region66: #{tpu_custom_call.1} parent=63 // pred_check_branch
          %1202 = sbr.rel (%p1200) target = $region68
        $region67: #{tpu_custom_call.1} parent=63 // pred_region
          %s1203 = sand.u32 %s210, 1
          %s1204 = scalar_lea.sflag [#allocation5], %s1203
          %s1205 = sand.u32 %s210, 1
          %s1206 = smul.addr %s1205, 48
          %s1207 = scalar_lea.vmem [#allocation6], %s1206
          %1208 = dma.done %s1204, 768
        $region68: #{tpu_custom_call.1} parent=63 // pred_fallthru
          _
      $region64: #{tpu_custom_call.1} parent=5 // pred_fallthru
        _
    $region6: #{tpu_custom_call.1} parent=1 // loop_footer
      %s22 = sadd.s32 1, %s18
    $region7: #{tpu_custom_call.1} parent=1 // loop_footer_branch
      %17 = sbr.rel target = $region3
    $region8: #{tpu_custom_call.1} parent=1 // loop_exit
      _
    %1209 = vsyncpa [#allocation4], 1
    %s1210 = scalar_lea.sflag [#allocation4], 1
    %1211 = vsyncpa %s1210, 1
    %1212 = vsyncpa [#allocation5], 1
    %s1213 = scalar_lea.sflag [#allocation5], 1
    %1214 = vsyncpa %s1213, 1

</llo_original>
